<compile_context>
chip_gen: v7x
topology: tpu7x:2x2x1
jax: 0.10.0
libtpu: 0.0.40
codegen_flags: <defaults>
</compile_context>

<pallas_src>
import functools
import math

import jax
import jax.numpy as jnp
from jax.experimental import pallas as pl
from jax.experimental.pallas import tpu as pltpu


# ------------------------------ tiling helper --------------------------------

def _pick_tile(dim, target, align):
    """Largest tile <= target that is `align`-aligned and divides `dim`.
    Falls back to the full dimension (always a legal BlockSpec size)."""
    if dim <= target:
        return dim
    t = (target // align) * align
    while t >= align:
        if dim % t == 0:
            return t
        t -= align
    return dim


# ------------------------------ tiled linear ---------------------------------

def _linear_kernel(x_ref, wt_ref, b_ref, o_ref, acc_ref):
    """One (tm, tn) output tile of  y = x @ Wt + b, accumulated over K tiles."""
    @pl.when(pl.program_id(3) == 0)
    def _init():
        acc_ref[...] = jnp.zeros_like(acc_ref)

    acc_ref[...] += jnp.dot(x_ref[...], wt_ref[...],
                            preferred_element_type=jnp.float32)

    @pl.when(pl.program_id(3) == pl.num_programs(3) - 1)
    def _finalize():
        o_ref[...] = (acc_ref[...] +
                      b_ref[...].astype(jnp.float32)).astype(o_ref.dtype)


def _pallas_linear(x2d, wt, bias, *, tm=256, tn=512, tk=512):
    """x2d: (M, K);  wt: (S, K, N) pre-transposed weights;  bias: (S, 1, N).
    Returns (S, M, N) = stack_s( x2d @ wt[s] + bias[s] )."""
    M, K = x2d.shape
    S, _, N = wt.shape
    tm = _pick_tile(M, tm, 8)
    tn = _pick_tile(N, tn, 128)
    tk = _pick_tile(K, tk, 128)
    grid = (S, M // tm, N // tn, K // tk)
    return pl.pallas_call(
        _linear_kernel,
        out_shape=jax.ShapeDtypeStruct((S, M, N), x2d.dtype),
        grid=grid,
        in_specs=[
            pl.BlockSpec((tm, tk), lambda s, i, j, k: (i, k)),
            pl.BlockSpec((None, tk, tn), lambda s, i, j, k: (s, k, j)),
            pl.BlockSpec((None, 1, tn), lambda s, i, j, k: (s, 0, j)),
        ],
        out_specs=pl.BlockSpec((None, tm, tn), lambda s, i, j, k: (s, i, j)),
        scratch_shapes=[pltpu.VMEM((tm, tn), jnp.float32)],
        compiler_params=pltpu.CompilerParams(
            dimension_semantics=("parallel", "parallel", "parallel",
                                 "arbitrary")),
    )(x2d, wt, bias)


# ------------------------- flash causal attention ----------------------------

def _flash_attn_kernel(q_ref, k_ref, v_ref, o_ref, m_ref, l_ref, acc_ref, *,
                       n_head):
    """Flash-style causal attention; all heads per grid step, lane-dense I/O."""
    qi = pl.program_id(1)
    ki = pl.program_id(2)
    nk = pl.num_programs(2)

    tq, C = q_ref.shape
    tkv = k_ref.shape[0]
    D = C // n_head
    scale = 1.0 / math.sqrt(D)
    q_start = qi * tq
    kv_start = ki * tkv

    @pl.when(ki == 0)
    def _init():
        m_ref[...] = jnp.full_like(m_ref, -jnp.inf)
        l_ref[...] = jnp.zeros_like(l_ref)
        acc_ref[...] = jnp.zeros_like(acc_ref)

    # Skip kv tiles that lie entirely above the causal diagonal.
    @pl.when(kv_start <= q_start + tq - 1)
    def _compute():
        q = q_ref[...]                                    # (tq,  C)
        k = k_ref[...]                                    # (tkv, C)
        v = v_ref[...]                                    # (tkv, C)
        row = q_start + jax.lax.broadcasted_iota(jnp.int32, (tq, tkv), 0)
        col = kv_start + jax.lax.broadcasted_iota(jnp.int32, (tq, tkv), 1)
        causal = col <= row

        for h in range(n_head):                           # static unroll
            sl = slice(h * D, (h + 1) * D)
            qh, kh, vh = q[:, sl], k[:, sl], v[:, sl]
            # q @ k^T via dot_general dimension numbers (no transposed tile).
            s = jax.lax.dot_general(
                qh, kh, (((1,), (1,)), ((), ())),
                preferred_element_type=jnp.float32) * scale      # (tq, tkv)
            s = jnp.where(causal, s, -jnp.inf)
            m_prev = m_ref[h]                                    # (tq, 1)
            m_new = jnp.maximum(m_prev, jnp.max(s, axis=-1, keepdims=True))
            alpha = jnp.exp(m_prev - m_new)
            p = jnp.exp(s - m_new)
            l_ref[h] = alpha * l_ref[h] + jnp.sum(p, axis=-1, keepdims=True)
            acc_ref[h] = alpha * acc_ref[h] + jnp.dot(
                p.astype(vh.dtype), vh, preferred_element_type=jnp.float32)
            m_ref[h] = m_new

    @pl.when(ki == nk - 1)
    def _finalize():
        outs = [acc_ref[h] * pl.reciprocal(l_ref[h], approx=True)
                for h in range(n_head)]
        # Head-merged (tq, C) store == y.transpose(1, 2).reshape(B, T, C).
        o_ref[...] = jnp.concatenate(outs, axis=-1).astype(o_ref.dtype)


def _pallas_flash_attention(qkv, n_head, *, tq=128, tkv=128):
    """qkv: (3, B, T, C) stacked q/k/v  ->  (B, T, C) attention output."""
    _, B, T, C = qkv.shape
    tq = _pick_tile(T, tq, 8)
    tkv = _pick_tile(T, tkv, 8)
    D = C // n_head
    grid = (B, T // tq, T // tkv)
    kernel = functools.partial(_flash_attn_kernel, n_head=n_head)
    return pl.pallas_call(
        kernel,
        out_shape=jax.ShapeDtypeStruct((B, T, C), qkv.dtype),
        grid=grid,
        in_specs=[
            pl.BlockSpec((None, None, tq, C), lambda b, qi, ki: (0, b, qi, 0)),
            pl.BlockSpec((None, None, tkv, C), lambda b, qi, ki: (1, b, ki, 0)),
            pl.BlockSpec((None, None, tkv, C), lambda b, qi, ki: (2, b, ki, 0)),
        ],
        out_specs=pl.BlockSpec((None, tq, C), lambda b, qi, ki: (b, qi, 0)),
        scratch_shapes=[
            pltpu.VMEM((n_head, tq, 1), jnp.float32),   # running max m
            pltpu.VMEM((n_head, tq, 1), jnp.float32),   # running sum l
            pltpu.VMEM((n_head, tq, D), jnp.float32),   # output accumulator
        ],
        compiler_params=pltpu.CompilerParams(
            dimension_semantics=("parallel", "parallel", "arbitrary")),
    )(qkv, qkv, qkv)


# ------------------------------ forward pass ----------------------------------

def causal_self_attention(x, params, n_head):
    """Matches CausalSelfAttention.forward in eval mode (dropout = 0.0)."""
    B, T, C = x.shape
    assert C % n_head == 0
    w_attn, b_attn = params["w_attn"], params["b_attn"]   # (3C, C), (3C,)
    w_proj, b_proj = params["w_proj"], params["b_proj"]   # (C, C), (C,)

    # One-time weight repack (outside the kernels): split qkv and transpose
    # to (K_in, N_out) so the kernels never transpose a tile.
    wt_attn = jnp.transpose(w_attn.reshape(3, C, C), (0, 2, 1))   # (3, C, C)
    bt_attn = b_attn.reshape(3, 1, C)
    wt_proj = jnp.transpose(w_proj)[None]                         # (1, C, C)
    bt_proj = b_proj.reshape(1, 1, C)

    # Fused q/k/v projection -> (3, B*T, C); q/k/v are never sliced/transposed
    # through HBM: the attention kernel indexes this buffer directly.
    qkv = _pallas_linear(x.reshape(B * T, C), wt_attn, bt_attn)
    qkv = qkv.reshape(3, B, T, C)          # contiguous (free) reshape

    # Flash-style causal attention; output already in head-merged (B, T, C).
    y = _pallas_flash_attention(qkv, n_head)

    # Output projection.
    # TODO(synk): attn_dropout / resid_dropout are identity at dropout=0.0.
    out = _pallas_linear(y.reshape(B * T, C), wt_proj, bt_proj)   # (1, B*T, C)
    return out.reshape(B, T, C)


# --------------------------- reference (pure JAX) -----------------------------

def _reference(x, params, n_head):
    B, T, C = x.shape
    D = C // n_head
    qkv = x.reshape(B * T, C) @ params["w_attn"].T + params["b_attn"]
    qkv = qkv.reshape(B, T, 3 * C)
    q, k, v = qkv[:, :, :C], qkv[:, :, C:2 * C], qkv[:, :, 2 * C:]
    q = q.reshape(B, T, n_head, D).transpose(0, 2, 1, 3)
    k = k.reshape(B, T, n_head, D).transpose(0, 2, 1, 3)
    v = v.reshape(B, T, n_head, D).transpose(0, 2, 1, 3)
    s = jnp.einsum("bhtd,bhsd->bhts", q, k) / math.sqrt(D)
    mask = jnp.tril(jnp.ones((T, T), dtype=bool))
    s = jnp.where(mask[None, None], s, -jnp.inf)
    a = jax.nn.softmax(s, axis=-1)
    y = jnp.einsum("bhts,bhsd->bhtd", a, v)
    y = y.transpose(0, 2, 1, 3).reshape(B * T, C)
    y = y @ params["w_proj"].T + params["b_proj"]
    return y.reshape(B, T, C)


# ----------------------------------- main --------------------------------------

if __name__ == "__main__":
    # config: n_embd=32, n_head=4, block_size=8, bias=True, dropout=0.0
    B, T, C, n_head = 2, 8, 32, 4

    key = jax.random.PRNGKey(0)
    k_x, k_wa, k_ba, k_wp, k_bp = jax.random.split(key, 5)

    x = jax.random.normal(k_x, (B, T, C), dtype=jnp.float32)
    params = {
        "w_attn": 0.02 * jax.random.normal(k_wa, (3 * C, C), dtype=jnp.float32),
        "b_attn": 0.02 * jax.random.normal(k_ba, (3 * C,), dtype=jnp.float32),
        "w_proj": 0.02 * jax.random.normal(k_wp, (C, C), dtype=jnp.float32),
        "b_proj": 0.02 * jax.random.normal(k_bp, (C,), dtype=jnp.float32),
    }

    fwd = jax.jit(functools.partial(causal_self_attention, n_head=n_head))
    y = jax.block_until_ready(fwd(x, params))

    y_ref = _reference(x, params, n_head)
    assert y.shape == (B, T, C)
    max_err = float(jnp.max(jnp.abs(y - y_ref)))
    # approx reciprocal in the softmax -> slightly looser tolerance than exact.
    assert max_err < 2e-3, f"mismatch vs reference: max abs err {max_err}"

    print("KERNEL_OK")
</pallas_src>

<mosaic_0001>
module attributes {stable_mosaic.version = 11 : i64} {
  func.func @_linear_kernel(%arg0: i32, %arg1: i32, %arg2: i32, %arg3: i32, %arg4: memref<16x32xf32, #tpu.memory_space<vmem>>, %arg5: memref<1x32x32xf32, #tpu.memory_space<vmem>>, %arg6: memref<1x1x32xf32, #tpu.memory_space<vmem>>, %arg7: memref<1x16x32xf32, #tpu.memory_space<vmem>>, %arg8: memref<16x32xf32, #tpu.memory_space<vmem>>) attributes {dimension_semantics = [#tpu.dimension_semantics<parallel>, #tpu.dimension_semantics<parallel>, #tpu.dimension_semantics<parallel>, #tpu.dimension_semantics<arbitrary>], iteration_bounds = array<i64: 3, 1, 1, 1>, scalar_prefetch = 0 : i64, scratch_operands = 1 : i64, tpu.core_type = #tpu.core_type<tc>, window_params = [{transform_indices = @transform_0, window_bounds = array<i64: 16, 32>}, {transform_indices = @transform_1, window_bounds = array<i64: 1, 32, 32>}, {transform_indices = @transform_2, window_bounds = array<i64: 1, 1, 32>}, {transform_indices = @transform_3, window_bounds = array<i64: 1, 16, 32>}]} {
    %c0_i32 = arith.constant 0 : i32
    %0 = arith.cmpi eq, %arg3, %c0_i32 : i32
    %1 = arith.extui %0 : i1 to i32
    %c0_i32_0 = arith.constant 0 : i32
    %2 = arith.cmpi ne, %1, %c0_i32_0 : i32
    scf.if %2 {
      %cst_11 = arith.constant 0.000000e+00 : f32
      %13 = vector.broadcast %cst_11 : f32 to vector<16x32xf32>
      %c0_12 = arith.constant 0 : index
      %c0_13 = arith.constant 0 : index
      %14 = vector.load %arg8[%c0_12, %c0_13] : memref<16x32xf32, #tpu.memory_space<vmem>>, vector<16x32xf32>
      tpu.vector_store %arg8[%c0_12, %c0_13], %13 {strides = array<i32>} : memref<16x32xf32, #tpu.memory_space<vmem>>, vector<16x32xf32>,
    } else {
    }
    %c0 = arith.constant 0 : index
    %c0_1 = arith.constant 0 : index
    %3 = vector.load %arg8[%c0, %c0_1] : memref<16x32xf32, #tpu.memory_space<vmem>>, vector<16x32xf32>
    %c0_2 = arith.constant 0 : index
    %c0_3 = arith.constant 0 : index
    %4 = vector.load %arg4[%c0_2, %c0_3] : memref<16x32xf32, #tpu.memory_space<vmem>>, vector<16x32xf32>
    %c0_4 = arith.constant 0 : index
    %c0_5 = arith.constant 0 : index
    %c0_6 = arith.constant 0 : index
    %5 = vector.load %arg5[%c0_4, %c0_5, %c0_6] : memref<1x32x32xf32, #tpu.memory_space<vmem>>, vector<1x32x32xf32>
    %6 = vector.shape_cast %5 : vector<1x32x32xf32> to vector<32x32xf32>
    %cst = arith.constant dense<0.000000e+00> : vector<16x32xf32>
    %7 = tpu.matmul %4, %6, %cst {dimension_numbers = #tpu.dot_dimension_numbers<[1], [0], [0], [1], [0, 0, 1, 1], [], []>} : vector<16x32xf32>, vector<32x32xf32>, vector<16x32xf32> -> vector<16x32xf32>
    %8 = arith.addf %3, %7 : vector<16x32xf32>
    %c0_7 = arith.constant 0 : index
    %c0_8 = arith.constant 0 : index
    %9 = vector.load %arg8[%c0_7, %c0_8] : memref<16x32xf32, #tpu.memory_space<vmem>>, vector<16x32xf32>
    tpu.vector_store %arg8[%c0_7, %c0_8], %8 {strides = array<i32>} : memref<16x32xf32, #tpu.memory_space<vmem>>, vector<16x32xf32>,
    %c0_i32_9 = arith.constant 0 : i32
    %10 = arith.cmpi eq, %arg3, %c0_i32_9 : i32
    %11 = arith.extui %10 : i1 to i32
    %c0_i32_10 = arith.constant 0 : i32
    %12 = arith.cmpi ne, %11, %c0_i32_10 : i32
    scf.if %12 {
      %c0_11 = arith.constant 0 : index
      %c0_12 = arith.constant 0 : index
      %13 = vector.load %arg8[%c0_11, %c0_12] : memref<16x32xf32, #tpu.memory_space<vmem>>, vector<16x32xf32>
      %c0_13 = arith.constant 0 : index
      %c0_14 = arith.constant 0 : index
      %c0_15 = arith.constant 0 : index
      %14 = vector.load %arg6[%c0_13, %c0_14, %c0_15] : memref<1x1x32xf32, #tpu.memory_space<vmem>>, vector<1x1x32xf32>
      %15 = vector.shape_cast %14 : vector<1x1x32xf32> to vector<1x32xf32>
      %16 = vector.broadcast %15 : vector<1x32xf32> to vector<16x32xf32>
      %17 = arith.addf %13, %16 : vector<16x32xf32>
      %c0_16 = arith.constant 0 : index
      %c0_17 = arith.constant 0 : index
      %c0_18 = arith.constant 0 : index
      %18 = vector.load %arg7[%c0_16, %c0_17, %c0_18] : memref<1x16x32xf32, #tpu.memory_space<vmem>>, vector<1x16x32xf32>
      %19 = vector.shape_cast %18 : vector<1x16x32xf32> to vector<16x32xf32>
      %20 = vector.shape_cast %17 : vector<16x32xf32> to vector<1x16x32xf32>
      tpu.vector_store %arg7[%c0_16, %c0_17, %c0_18], %20 {strides = array<i32>} : memref<1x16x32xf32, #tpu.memory_space<vmem>>, vector<1x16x32xf32>,
    } else {
    }
    return
  }
  func.func @transform_0(%arg0: i32, %arg1: i32, %arg2: i32, %arg3: i32) -> (i32, i32) {
    %c0_i32 = arith.constant 0 : i32
    return %arg1, %arg3 : i32, i32
  }
  func.func @transform_1(%arg0: i32, %arg1: i32, %arg2: i32, %arg3: i32) -> (i32, i32, i32) {
    %c0_i32 = arith.constant 0 : i32
    return %arg0, %arg3, %arg2 : i32, i32, i32
  }
  func.func @transform_2(%arg0: i32, %arg1: i32, %arg2: i32, %arg3: i32) -> (i32, i32, i32) {
    %c0_i32 = arith.constant 0 : i32
    %c0_i32_0 = arith.constant 0 : i32
    return %arg0, %c0_i32, %arg2 : i32, i32, i32
  }
  func.func @transform_3(%arg0: i32, %arg1: i32, %arg2: i32, %arg3: i32) -> (i32, i32, i32) {
    %c0_i32 = arith.constant 0 : i32
    return %arg0, %arg1, %arg2 : i32, i32, i32
  }
}

module attributes {stable_mosaic.version = 11 : i64} {
  func.func @_linear_kernel(%arg0: i32, %arg1: i32, %arg2: i32, %arg3: i32, %arg4: memref<16x32xf32, #tpu.memory_space<vmem>>, %arg5: memref<1x32x32xf32, #tpu.memory_space<vmem>>, %arg6: memref<1x1x32xf32, #tpu.memory_space<vmem>>, %arg7: memref<1x16x32xf32, #tpu.memory_space<vmem>>, %arg8: memref<16x32xf32, #tpu.memory_space<vmem>>) attributes {dimension_semantics = [#tpu.dimension_semantics<parallel>, #tpu.dimension_semantics<parallel>, #tpu.dimension_semantics<parallel>, #tpu.dimension_semantics<arbitrary>], iteration_bounds = array<i64: 1, 1, 1, 1>, scalar_prefetch = 0 : i64, scratch_operands = 1 : i64, tpu.core_type = #tpu.core_type<tc>, window_params = [{transform_indices = @transform_0, window_bounds = array<i64: 16, 32>}, {transform_indices = @transform_1, window_bounds = array<i64: 1, 32, 32>}, {transform_indices = @transform_2, window_bounds = array<i64: 1, 1, 32>}, {transform_indices = @transform_3, window_bounds = array<i64: 1, 16, 32>}]} {
    %c0_i32 = arith.constant 0 : i32
    %0 = arith.cmpi eq, %arg3, %c0_i32 : i32
    %1 = arith.extui %0 : i1 to i32
    %c0_i32_0 = arith.constant 0 : i32
    %2 = arith.cmpi ne, %1, %c0_i32_0 : i32
    scf.if %2 {
      %cst_11 = arith.constant 0.000000e+00 : f32
      %13 = vector.broadcast %cst_11 : f32 to vector<16x32xf32>
      %c0_12 = arith.constant 0 : index
      %c0_13 = arith.constant 0 : index
      %14 = vector.load %arg8[%c0_12, %c0_13] : memref<16x32xf32, #tpu.memory_space<vmem>>, vector<16x32xf32>
      tpu.vector_store %arg8[%c0_12, %c0_13], %13 {strides = array<i32>} : memref<16x32xf32, #tpu.memory_space<vmem>>, vector<16x32xf32>,
    } else {
    }
    %c0 = arith.constant 0 : index
    %c0_1 = arith.constant 0 : index
    %3 = vector.load %arg8[%c0, %c0_1] : memref<16x32xf32, #tpu.memory_space<vmem>>, vector<16x32xf32>
    %c0_2 = arith.constant 0 : index
    %c0_3 = arith.constant 0 : index
    %4 = vector.load %arg4[%c0_2, %c0_3] : memref<16x32xf32, #tpu.memory_space<vmem>>, vector<16x32xf32>
    %c0_4 = arith.constant 0 : index
    %c0_5 = arith.constant 0 : index
    %c0_6 = arith.constant 0 : index
    %5 = vector.load %arg5[%c0_4, %c0_5, %c0_6] : memref<1x32x32xf32, #tpu.memory_space<vmem>>, vector<1x32x32xf32>
    %6 = vector.shape_cast %5 : vector<1x32x32xf32> to vector<32x32xf32>
    %cst = arith.constant dense<0.000000e+00> : vector<16x32xf32>
    %7 = tpu.matmul %4, %6, %cst {dimension_numbers = #tpu.dot_dimension_numbers<[1], [0], [0], [1], [0, 0, 1, 1], [], []>} : vector<16x32xf32>, vector<32x32xf32>, vector<16x32xf32> -> vector<16x32xf32>
    %8 = arith.addf %3, %7 : vector<16x32xf32>
    %c0_7 = arith.constant 0 : index
    %c0_8 = arith.constant 0 : index
    %9 = vector.load %arg8[%c0_7, %c0_8] : memref<16x32xf32, #tpu.memory_space<vmem>>, vector<16x32xf32>
    tpu.vector_store %arg8[%c0_7, %c0_8], %8 {strides = array<i32>} : memref<16x32xf32, #tpu.memory_space<vmem>>, vector<16x32xf32>,
    %c0_i32_9 = arith.constant 0 : i32
    %10 = arith.cmpi eq, %arg3, %c0_i32_9 : i32
    %11 = arith.extui %10 : i1 to i32
    %c0_i32_10 = arith.constant 0 : i32
    %12 = arith.cmpi ne, %11, %c0_i32_10 : i32
    scf.if %12 {
      %c0_11 = arith.constant 0 : index
      %c0_12 = arith.constant 0 : index
      %13 = vector.load %arg8[%c0_11, %c0_12] : memref<16x32xf32, #tpu.memory_space<vmem>>, vector<16x32xf32>
      %c0_13 = arith.constant 0 : index
      %c0_14 = arith.constant 0 : index
      %c0_15 = arith.constant 0 : index
      %14 = vector.load %arg6[%c0_13, %c0_14, %c0_15] : memref<1x1x32xf32, #tpu.memory_space<vmem>>, vector<1x1x32xf32>
      %15 = vector.shape_cast %14 : vector<1x1x32xf32> to vector<1x32xf32>
      %16 = vector.broadcast %15 : vector<1x32xf32> to vector<16x32xf32>
      %17 = arith.addf %13, %16 : vector<16x32xf32>
      %c0_16 = arith.constant 0 : index
      %c0_17 = arith.constant 0 : index
      %c0_18 = arith.constant 0 : index
      %18 = vector.load %arg7[%c0_16, %c0_17, %c0_18] : memref<1x16x32xf32, #tpu.memory_space<vmem>>, vector<1x16x32xf32>
      %19 = vector.shape_cast %18 : vector<1x16x32xf32> to vector<16x32xf32>
      %20 = vector.shape_cast %17 : vector<16x32xf32> to vector<1x16x32xf32>
      tpu.vector_store %arg7[%c0_16, %c0_17, %c0_18], %20 {strides = array<i32>} : memref<1x16x32xf32, #tpu.memory_space<vmem>>, vector<1x16x32xf32>,
    } else {
    }
    return
  }
  func.func @transform_0(%arg0: i32, %arg1: i32, %arg2: i32, %arg3: i32) -> (i32, i32) {
    %c0_i32 = arith.constant 0 : i32
    return %arg1, %arg3 : i32, i32
  }
  func.func @transform_1(%arg0: i32, %arg1: i32, %arg2: i32, %arg3: i32) -> (i32, i32, i32) {
    %c0_i32 = arith.constant 0 : i32
    return %arg0, %arg3, %arg2 : i32, i32, i32
  }
  func.func @transform_2(%arg0: i32, %arg1: i32, %arg2: i32, %arg3: i32) -> (i32, i32, i32) {
    %c0_i32 = arith.constant 0 : i32
    %c0_i32_0 = arith.constant 0 : i32
    return %arg0, %c0_i32, %arg2 : i32, i32, i32
  }
  func.func @transform_3(%arg0: i32, %arg1: i32, %arg2: i32, %arg3: i32) -> (i32, i32, i32) {
    %c0_i32 = arith.constant 0 : i32
    return %arg0, %arg1, %arg2 : i32, i32, i32
  }
}

module attributes {stable_mosaic.version = 11 : i64} {
  func.func @_flash_attn_kernel(%arg0: i32, %arg1: i32, %arg2: i32, %arg3: memref<1x1x8x32xf32, #tpu.memory_space<vmem>>, %arg4: memref<1x1x8x32xf32, #tpu.memory_space<vmem>>, %arg5: memref<1x1x8x32xf32, #tpu.memory_space<vmem>>, %arg6: memref<1x8x32xf32, #tpu.memory_space<vmem>>, %arg7: memref<4x8x1xf32, #tpu.memory_space<vmem>>, %arg8: memref<4x8x1xf32, #tpu.memory_space<vmem>>, %arg9: memref<4x8x8xf32, #tpu.memory_space<vmem>>) attributes {dimension_semantics = [#tpu.dimension_semantics<parallel>, #tpu.dimension_semantics<parallel>, #tpu.dimension_semantics<arbitrary>], iteration_bounds = array<i64: 2, 1, 1>, scalar_prefetch = 0 : i64, scratch_operands = 3 : i64, tpu.core_type = #tpu.core_type<tc>, window_params = [{transform_indices = @transform_0, window_bounds = array<i64: 1, 1, 8, 32>}, {transform_indices = @transform_1, window_bounds = array<i64: 1, 1, 8, 32>}, {transform_indices = @transform_2, window_bounds = array<i64: 1, 1, 8, 32>}, {transform_indices = @transform_3, window_bounds = array<i64: 1, 8, 32>}]} {
    %c8_i32 = arith.constant 8 : i32
    %0 = arith.muli %arg1, %c8_i32 : i32
    %c8_i32_0 = arith.constant 8 : i32
    %1 = arith.muli %arg2, %c8_i32_0 : i32
    %c0_i32 = arith.constant 0 : i32
    %2 = arith.cmpi eq, %arg2, %c0_i32 : i32
    %3 = arith.extui %2 : i1 to i32
    %c0_i32_1 = arith.constant 0 : i32
    %4 = arith.cmpi ne, %3, %c0_i32_1 : i32
    scf.if %4 {
      %cst = arith.constant 0xFF800000 : f32
      %13 = vector.broadcast %cst : f32 to vector<4x8x1xf32>
      %c0 = arith.constant 0 : index
      %c0_6 = arith.constant 0 : index
      %c0_7 = arith.constant 0 : index
      %14 = vector.load %arg7[%c0, %c0_6, %c0_7] : memref<4x8x1xf32, #tpu.memory_space<vmem>>, vector<4x8x1xf32>
      tpu.vector_store %arg7[%c0, %c0_6, %c0_7], %13 {strides = array<i32>} : memref<4x8x1xf32, #tpu.memory_space<vmem>>, vector<4x8x1xf32>,
      %cst_8 = arith.constant 0.000000e+00 : f32
      %15 = vector.broadcast %cst_8 : f32 to vector<4x8x1xf32>
      %c0_9 = arith.constant 0 : index
      %c0_10 = arith.constant 0 : index
      %c0_11 = arith.constant 0 : index
      %16 = vector.load %arg8[%c0_9, %c0_10, %c0_11] : memref<4x8x1xf32, #tpu.memory_space<vmem>>, vector<4x8x1xf32>
      tpu.vector_store %arg8[%c0_9, %c0_10, %c0_11], %15 {strides = array<i32>} : memref<4x8x1xf32, #tpu.memory_space<vmem>>, vector<4x8x1xf32>,
      %cst_12 = arith.constant 0.000000e+00 : f32
      %17 = vector.broadcast %cst_12 : f32 to vector<4x8x8xf32>
      %c0_13 = arith.constant 0 : index
      %c0_14 = arith.constant 0 : index
      %c0_15 = arith.constant 0 : index
      %18 = vector.load %arg9[%c0_13, %c0_14, %c0_15] : memref<4x8x8xf32, #tpu.memory_space<vmem>>, vector<4x8x8xf32>
      tpu.vector_store %arg9[%c0_13, %c0_14, %c0_15], %17 {strides = array<i32>} : memref<4x8x8xf32, #tpu.memory_space<vmem>>, vector<4x8x8xf32>,
    } else {
    }
    %c8_i32_2 = arith.constant 8 : i32
    %5 = arith.addi %0, %c8_i32_2 : i32
    %c1_i32 = arith.constant 1 : i32
    %6 = arith.subi %5, %c1_i32 : i32
    %7 = arith.cmpi sle, %1, %6 : i32
    %8 = arith.extui %7 : i1 to i32
    %c0_i32_3 = arith.constant 0 : i32
    %9 = arith.cmpi ne, %8, %c0_i32_3 : i32
    scf.if %9 {
      %c0 = arith.constant 0 : index
      %c0_6 = arith.constant 0 : index
      %c0_7 = arith.constant 0 : index
      %c0_8 = arith.constant 0 : index
      %13 = vector.load %arg3[%c0, %c0_6, %c0_7, %c0_8] : memref<1x1x8x32xf32, #tpu.memory_space<vmem>>, vector<1x1x8x32xf32>
      %14 = vector.shape_cast %13 : vector<1x1x8x32xf32> to vector<8x32xf32>
      %c0_9 = arith.constant 0 : index
      %c0_10 = arith.constant 0 : index
      %c0_11 = arith.constant 0 : index
      %c0_12 = arith.constant 0 : index
      %15 = vector.load %arg4[%c0_9, %c0_10, %c0_11, %c0_12] : memref<1x1x8x32xf32, #tpu.memory_space<vmem>>, vector<1x1x8x32xf32>
      %16 = vector.shape_cast %15 : vector<1x1x8x32xf32> to vector<8x32xf32>
      %c0_13 = arith.constant 0 : index
      %c0_14 = arith.constant 0 : index
      %c0_15 = arith.constant 0 : index
      %c0_16 = arith.constant 0 : index
      %17 = vector.load %arg5[%c0_13, %c0_14, %c0_15, %c0_16] : memref<1x1x8x32xf32, #tpu.memory_space<vmem>>, vector<1x1x8x32xf32>
      %18 = vector.shape_cast %17 : vector<1x1x8x32xf32> to vector<8x32xf32>
      %19 = tpu.iota {dimensions = array<i32: 0>} : vector<8x8xi32>
      %20 = vector.broadcast %0 : i32 to vector<8x8xi32>
      %21 = arith.addi %20, %19 : vector<8x8xi32>
      %22 = tpu.iota {dimensions = array<i32: 1>} : vector<8x8xi32>
      %23 = vector.broadcast %1 : i32 to vector<8x8xi32>
      %24 = arith.addi %23, %22 : vector<8x8xi32>
      %25 = arith.cmpi sle, %24, %21 : vector<8x8xi32>
      %26 = vector.extract_strided_slice %14 {offsets = [0, 0], sizes = [8, 8], strides = [1, 1]} : vector<8x32xf32> to vector<8x8xf32>
      %27 = vector.extract_strided_slice %16 {offsets = [0, 0], sizes = [8, 8], strides = [1, 1]} : vector<8x32xf32> to vector<8x8xf32>
      %28 = vector.extract_strided_slice %18 {offsets = [0, 0], sizes = [8, 8], strides = [1, 1]} : vector<8x32xf32> to vector<8x8xf32>
      %cst = arith.constant dense<0.000000e+00> : vector<8x8xf32>
      %29 = tpu.matmul %26, %27, %cst {dimension_numbers = #tpu.dot_dimension_numbers<[1], [1], [0], [0], [0, 0, 1, 0], [], []>} : vector<8x8xf32>, vector<8x8xf32>, vector<8x8xf32> -> vector<8x8xf32>
      %cst_17 = arith.constant 0.353553385 : f32
      %30 = vector.broadcast %cst_17 : f32 to vector<8x8xf32>
      %31 = arith.mulf %29, %30 : vector<8x8xf32>
      %cst_18 = arith.constant 0xFF800000 : f32
      %32 = vector.broadcast %cst_18 : f32 to vector<8x8xf32>
      %33 = arith.select %25, %31, %32 : vector<8x8xi1>, vector<8x8xf32>
      %c0_19 = arith.constant 0 : index
      %c0_20 = arith.constant 0 : index
      %c0_21 = arith.constant 0 : index
      %34 = vector.load %arg7[%c0_19, %c0_20, %c0_21] : memref<4x8x1xf32, #tpu.memory_space<vmem>>, vector<1x8x1xf32>
      %35 = vector.shape_cast %34 : vector<1x8x1xf32> to vector<8x1xf32>
      %cst_22 = arith.constant dense<0xFF800000> : vector<8xf32>
      %36 = vector.multi_reduction <maximumf>, %33, %cst_22 [1] : vector<8x8xf32> to vector<8xf32>
      %37 = vector.shape_cast %36 : vector<8xf32> to vector<8x1xf32>
      %38 = arith.maximumf %35, %37 : vector<8x1xf32>
      %39 = arith.subf %35, %38 : vector<8x1xf32>
      %40 = math.exp %39 : vector<8x1xf32>
      %41 = vector.broadcast %38 : vector<8x1xf32> to vector<8x8xf32>
      %42 = arith.subf %33, %41 : vector<8x8xf32>
      %43 = math.exp %42 : vector<8x8xf32>
      %c0_23 = arith.constant 0 : index
      %c0_24 = arith.constant 0 : index
      %c0_25 = arith.constant 0 : index
      %44 = vector.load %arg8[%c0_23, %c0_24, %c0_25] : memref<4x8x1xf32, #tpu.memory_space<vmem>>, vector<1x8x1xf32>
      %45 = vector.shape_cast %44 : vector<1x8x1xf32> to vector<8x1xf32>
      %46 = arith.mulf %40, %45 : vector<8x1xf32>
      %cst_26 = arith.constant dense<0.000000e+00> : vector<8xf32>
      %47 = vector.multi_reduction <add>, %43, %cst_26 [1] : vector<8x8xf32> to vector<8xf32>
      %48 = vector.shape_cast %47 : vector<8xf32> to vector<8x1xf32>
      %49 = arith.addf %46, %48 : vector<8x1xf32>
      %c0_27 = arith.constant 0 : index
      %c0_28 = arith.constant 0 : index
      %c0_29 = arith.constant 0 : index
      %50 = vector.load %arg8[%c0_27, %c0_28, %c0_29] : memref<4x8x1xf32, #tpu.memory_space<vmem>>, vector<1x8x1xf32>
      %51 = vector.shape_cast %50 : vector<1x8x1xf32> to vector<8x1xf32>
      %52 = vector.shape_cast %49 : vector<8x1xf32> to vector<1x8x1xf32>
      tpu.vector_store %arg8[%c0_27, %c0_28, %c0_29], %52 {strides = array<i32>} : memref<4x8x1xf32, #tpu.memory_space<vmem>>, vector<1x8x1xf32>,
      %c0_30 = arith.constant 0 : index
      %c0_31 = arith.constant 0 : index
      %c0_32 = arith.constant 0 : index
      %53 = vector.load %arg9[%c0_30, %c0_31, %c0_32] : memref<4x8x8xf32, #tpu.memory_space<vmem>>, vector<1x8x8xf32>
      %54 = vector.shape_cast %53 : vector<1x8x8xf32> to vector<8x8xf32>
      %55 = vector.broadcast %40 : vector<8x1xf32> to vector<8x8xf32>
      %56 = arith.mulf %55, %54 : vector<8x8xf32>
      %cst_33 = arith.constant dense<0.000000e+00> : vector<8x8xf32>
      %57 = tpu.matmul %43, %28, %cst_33 {dimension_numbers = #tpu.dot_dimension_numbers<[1], [0], [0], [1], [0, 0, 1, 1], [], []>} : vector<8x8xf32>, vector<8x8xf32>, vector<8x8xf32> -> vector<8x8xf32>
      %58 = arith.addf %56, %57 : vector<8x8xf32>
      %c0_34 = arith.constant 0 : index
      %c0_35 = arith.constant 0 : index
      %c0_36 = arith.constant 0 : index
      %59 = vector.load %arg9[%c0_34, %c0_35, %c0_36] : memref<4x8x8xf32, #tpu.memory_space<vmem>>, vector<1x8x8xf32>
      %60 = vector.shape_cast %59 : vector<1x8x8xf32> to vector<8x8xf32>
      %61 = vector.shape_cast %58 : vector<8x8xf32> to vector<1x8x8xf32>
      tpu.vector_store %arg9[%c0_34, %c0_35, %c0_36], %61 {strides = array<i32>} : memref<4x8x8xf32, #tpu.memory_space<vmem>>, vector<1x8x8xf32>,
      %c0_37 = arith.constant 0 : index
      %c0_38 = arith.constant 0 : index
      %c0_39 = arith.constant 0 : index
      %62 = vector.load %arg7[%c0_37, %c0_38, %c0_39] : memref<4x8x1xf32, #tpu.memory_space<vmem>>, vector<1x8x1xf32>
      %63 = vector.shape_cast %62 : vector<1x8x1xf32> to vector<8x1xf32>
      %64 = vector.shape_cast %38 : vector<8x1xf32> to vector<1x8x1xf32>
      tpu.vector_store %arg7[%c0_37, %c0_38, %c0_39], %64 {strides = array<i32>} : memref<4x8x1xf32, #tpu.memory_space<vmem>>, vector<1x8x1xf32>,
      %65 = vector.extract_strided_slice %14 {offsets = [0, 8], sizes = [8, 8], strides = [1, 1]} : vector<8x32xf32> to vector<8x8xf32>
      %66 = vector.extract_strided_slice %16 {offsets = [0, 8], sizes = [8, 8], strides = [1, 1]} : vector<8x32xf32> to vector<8x8xf32>
      %67 = vector.extract_strided_slice %18 {offsets = [0, 8], sizes = [8, 8], strides = [1, 1]} : vector<8x32xf32> to vector<8x8xf32>
      %cst_40 = arith.constant dense<0.000000e+00> : vector<8x8xf32>
      %68 = tpu.matmul %65, %66, %cst_40 {dimension_numbers = #tpu.dot_dimension_numbers<[1], [1], [0], [0], [0, 0, 1, 0], [], []>} : vector<8x8xf32>, vector<8x8xf32>, vector<8x8xf32> -> vector<8x8xf32>
      %cst_41 = arith.constant 0.353553385 : f32
      %69 = vector.broadcast %cst_41 : f32 to vector<8x8xf32>
      %70 = arith.mulf %68, %69 : vector<8x8xf32>
      %cst_42 = arith.constant 0xFF800000 : f32
      %71 = vector.broadcast %cst_42 : f32 to vector<8x8xf32>
      %72 = arith.select %25, %70, %71 : vector<8x8xi1>, vector<8x8xf32>
      %c1 = arith.constant 1 : index
      %c0_43 = arith.constant 0 : index
      %c0_44 = arith.constant 0 : index
      %73 = vector.load %arg7[%c1, %c0_43, %c0_44] : memref<4x8x1xf32, #tpu.memory_space<vmem>>, vector<1x8x1xf32>
      %74 = vector.shape_cast %73 : vector<1x8x1xf32> to vector<8x1xf32>
      %cst_45 = arith.constant dense<0xFF800000> : vector<8xf32>
      %75 = vector.multi_reduction <maximumf>, %72, %cst_45 [1] : vector<8x8xf32> to vector<8xf32>
      %76 = vector.shape_cast %75 : vector<8xf32> to vector<8x1xf32>
      %77 = arith.maximumf %74, %76 : vector<8x1xf32>
      %78 = arith.subf %74, %77 : vector<8x1xf32>
      %79 = math.exp %78 : vector<8x1xf32>
      %80 = vector.broadcast %77 : vector<8x1xf32> to vector<8x8xf32>
      %81 = arith.subf %72, %80 : vector<8x8xf32>
      %82 = math.exp %81 : vector<8x8xf32>
      %c1_46 = arith.constant 1 : index
      %c0_47 = arith.constant 0 : index
      %c0_48 = arith.constant 0 : index
      %83 = vector.load %arg8[%c1_46, %c0_47, %c0_48] : memref<4x8x1xf32, #tpu.memory_space<vmem>>, vector<1x8x1xf32>
      %84 = vector.shape_cast %83 : vector<1x8x1xf32> to vector<8x1xf32>
      %85 = arith.mulf %79, %84 : vector<8x1xf32>
      %cst_49 = arith.constant dense<0.000000e+00> : vector<8xf32>
      %86 = vector.multi_reduction <add>, %82, %cst_49 [1] : vector<8x8xf32> to vector<8xf32>
      %87 = vector.shape_cast %86 : vector<8xf32> to vector<8x1xf32>
      %88 = arith.addf %85, %87 : vector<8x1xf32>
      %c1_50 = arith.constant 1 : index
      %c0_51 = arith.constant 0 : index
      %c0_52 = arith.constant 0 : index
      %89 = vector.load %arg8[%c1_50, %c0_51, %c0_52] : memref<4x8x1xf32, #tpu.memory_space<vmem>>, vector<1x8x1xf32>
      %90 = vector.shape_cast %89 : vector<1x8x1xf32> to vector<8x1xf32>
      %91 = vector.shape_cast %88 : vector<8x1xf32> to vector<1x8x1xf32>
      tpu.vector_store %arg8[%c1_50, %c0_51, %c0_52], %91 {strides = array<i32>} : memref<4x8x1xf32, #tpu.memory_space<vmem>>, vector<1x8x1xf32>,
      %c1_53 = arith.constant 1 : index
      %c0_54 = arith.constant 0 : index
      %c0_55 = arith.constant 0 : index
      %92 = vector.load %arg9[%c1_53, %c0_54, %c0_55] : memref<4x8x8xf32, #tpu.memory_space<vmem>>, vector<1x8x8xf32>
      %93 = vector.shape_cast %92 : vector<1x8x8xf32> to vector<8x8xf32>
      %94 = vector.broadcast %79 : vector<8x1xf32> to vector<8x8xf32>
      %95 = arith.mulf %94, %93 : vector<8x8xf32>
      %cst_56 = arith.constant dense<0.000000e+00> : vector<8x8xf32>
      %96 = tpu.matmul %82, %67, %cst_56 {dimension_numbers = #tpu.dot_dimension_numbers<[1], [0], [0], [1], [0, 0, 1, 1], [], []>} : vector<8x8xf32>, vector<8x8xf32>, vector<8x8xf32> -> vector<8x8xf32>
      %97 = arith.addf %95, %96 : vector<8x8xf32>
      %c1_57 = arith.constant 1 : index
      %c0_58 = arith.constant 0 : index
      %c0_59 = arith.constant 0 : index
      %98 = vector.load %arg9[%c1_57, %c0_58, %c0_59] : memref<4x8x8xf32, #tpu.memory_space<vmem>>, vector<1x8x8xf32>
      %99 = vector.shape_cast %98 : vector<1x8x8xf32> to vector<8x8xf32>
      %100 = vector.shape_cast %97 : vector<8x8xf32> to vector<1x8x8xf32>
      tpu.vector_store %arg9[%c1_57, %c0_58, %c0_59], %100 {strides = array<i32>} : memref<4x8x8xf32, #tpu.memory_space<vmem>>, vector<1x8x8xf32>,
      %c1_60 = arith.constant 1 : index
      %c0_61 = arith.constant 0 : index
      %c0_62 = arith.constant 0 : index
      %101 = vector.load %arg7[%c1_60, %c0_61, %c0_62] : memref<4x8x1xf32, #tpu.memory_space<vmem>>, vector<1x8x1xf32>
      %102 = vector.shape_cast %101 : vector<1x8x1xf32> to vector<8x1xf32>
      %103 = vector.shape_cast %77 : vector<8x1xf32> to vector<1x8x1xf32>
      tpu.vector_store %arg7[%c1_60, %c0_61, %c0_62], %103 {strides = array<i32>} : memref<4x8x1xf32, #tpu.memory_space<vmem>>, vector<1x8x1xf32>,
      %104 = vector.extract_strided_slice %14 {offsets = [0, 16], sizes = [8, 8], strides = [1, 1]} : vector<8x32xf32> to vector<8x8xf32>
      %105 = vector.extract_strided_slice %16 {offsets = [0, 16], sizes = [8, 8], strides = [1, 1]} : vector<8x32xf32> to vector<8x8xf32>
      %106 = vector.extract_strided_slice %18 {offsets = [0, 16], sizes = [8, 8], strides = [1, 1]} : vector<8x32xf32> to vector<8x8xf32>
      %cst_63 = arith.constant dense<0.000000e+00> : vector<8x8xf32>
      %107 = tpu.matmul %104, %105, %cst_63 {dimension_numbers = #tpu.dot_dimension_numbers<[1], [1], [0], [0], [0, 0, 1, 0], [], []>} : vector<8x8xf32>, vector<8x8xf32>, vector<8x8xf32> -> vector<8x8xf32>
      %cst_64 = arith.constant 0.353553385 : f32
      %108 = vector.broadcast %cst_64 : f32 to vector<8x8xf32>
      %109 = arith.mulf %107, %108 : vector<8x8xf32>
      %cst_65 = arith.constant 0xFF800000 : f32
      %110 = vector.broadcast %cst_65 : f32 to vector<8x8xf32>
      %111 = arith.select %25, %109, %110 : vector<8x8xi1>, vector<8x8xf32>
      %c2 = arith.constant 2 : index
      %c0_66 = arith.constant 0 : index
      %c0_67 = arith.constant 0 : index
      %112 = vector.load %arg7[%c2, %c0_66, %c0_67] : memref<4x8x1xf32, #tpu.memory_space<vmem>>, vector<1x8x1xf32>
      %113 = vector.shape_cast %112 : vector<1x8x1xf32> to vector<8x1xf32>
      %cst_68 = arith.constant dense<0xFF800000> : vector<8xf32>
      %114 = vector.multi_reduction <maximumf>, %111, %cst_68 [1] : vector<8x8xf32> to vector<8xf32>
      %115 = vector.shape_cast %114 : vector<8xf32> to vector<8x1xf32>
      %116 = arith.maximumf %113, %115 : vector<8x1xf32>
      %117 = arith.subf %113, %116 : vector<8x1xf32>
      %118 = math.exp %117 : vector<8x1xf32>
      %119 = vector.broadcast %116 : vector<8x1xf32> to vector<8x8xf32>
      %120 = arith.subf %111, %119 : vector<8x8xf32>
      %121 = math.exp %120 : vector<8x8xf32>
      %c2_69 = arith.constant 2 : index
      %c0_70 = arith.constant 0 : index
      %c0_71 = arith.constant 0 : index
      %122 = vector.load %arg8[%c2_69, %c0_70, %c0_71] : memref<4x8x1xf32, #tpu.memory_space<vmem>>, vector<1x8x1xf32>
      %123 = vector.shape_cast %122 : vector<1x8x1xf32> to vector<8x1xf32>
      %124 = arith.mulf %118, %123 : vector<8x1xf32>
      %cst_72 = arith.constant dense<0.000000e+00> : vector<8xf32>
      %125 = vector.multi_reduction <add>, %121, %cst_72 [1] : vector<8x8xf32> to vector<8xf32>
      %126 = vector.shape_cast %125 : vector<8xf32> to vector<8x1xf32>
      %127 = arith.addf %124, %126 : vector<8x1xf32>
      %c2_73 = arith.constant 2 : index
      %c0_74 = arith.constant 0 : index
      %c0_75 = arith.constant 0 : index
      %128 = vector.load %arg8[%c2_73, %c0_74, %c0_75] : memref<4x8x1xf32, #tpu.memory_space<vmem>>, vector<1x8x1xf32>
      %129 = vector.shape_cast %128 : vector<1x8x1xf32> to vector<8x1xf32>
      %130 = vector.shape_cast %127 : vector<8x1xf32> to vector<1x8x1xf32>
      tpu.vector_store %arg8[%c2_73, %c0_74, %c0_75], %130 {strides = array<i32>} : memref<4x8x1xf32, #tpu.memory_space<vmem>>, vector<1x8x1xf32>,
      %c2_76 = arith.constant 2 : index
      %c0_77 = arith.constant 0 : index
      %c0_78 = arith.constant 0 : index
      %131 = vector.load %arg9[%c2_76, %c0_77, %c0_78] : memref<4x8x8xf32, #tpu.memory_space<vmem>>, vector<1x8x8xf32>
      %132 = vector.shape_cast %131 : vector<1x8x8xf32> to vector<8x8xf32>
      %133 = vector.broadcast %118 : vector<8x1xf32> to vector<8x8xf32>
      %134 = arith.mulf %133, %132 : vector<8x8xf32>
      %cst_79 = arith.constant dense<0.000000e+00> : vector<8x8xf32>
      %135 = tpu.matmul %121, %106, %cst_79 {dimension_numbers = #tpu.dot_dimension_numbers<[1], [0], [0], [1], [0, 0, 1, 1], [], []>} : vector<8x8xf32>, vector<8x8xf32>, vector<8x8xf32> -> vector<8x8xf32>
      %136 = arith.addf %134, %135 : vector<8x8xf32>
      %c2_80 = arith.constant 2 : index
      %c0_81 = arith.constant 0 : index
      %c0_82 = arith.constant 0 : index
      %137 = vector.load %arg9[%c2_80, %c0_81, %c0_82] : memref<4x8x8xf32, #tpu.memory_space<vmem>>, vector<1x8x8xf32>
      %138 = vector.shape_cast %137 : vector<1x8x8xf32> to vector<8x8xf32>
      %139 = vector.shape_cast %136 : vector<8x8xf32> to vector<1x8x8xf32>
      tpu.vector_store %arg9[%c2_80, %c0_81, %c0_82], %139 {strides = array<i32>} : memref<4x8x8xf32, #tpu.memory_space<vmem>>, vector<1x8x8xf32>,
      %c2_83 = arith.constant 2 : index
      %c0_84 = arith.constant 0 : index
      %c0_85 = arith.constant 0 : index
      %140 = vector.load %arg7[%c2_83, %c0_84, %c0_85] : memref<4x8x1xf32, #tpu.memory_space<vmem>>, vector<1x8x1xf32>
      %141 = vector.shape_cast %140 : vector<1x8x1xf32> to vector<8x1xf32>
      %142 = vector.shape_cast %116 : vector<8x1xf32> to vector<1x8x1xf32>
      tpu.vector_store %arg7[%c2_83, %c0_84, %c0_85], %142 {strides = array<i32>} : memref<4x8x1xf32, #tpu.memory_space<vmem>>, vector<1x8x1xf32>,
      %143 = vector.extract_strided_slice %14 {offsets = [0, 24], sizes = [8, 8], strides = [1, 1]} : vector<8x32xf32> to vector<8x8xf32>
      %144 = vector.extract_strided_slice %16 {offsets = [0, 24], sizes = [8, 8], strides = [1, 1]} : vector<8x32xf32> to vector<8x8xf32>
      %145 = vector.extract_strided_slice %18 {offsets = [0, 24], sizes = [8, 8], strides = [1, 1]} : vector<8x32xf32> to vector<8x8xf32>
      %cst_86 = arith.constant dense<0.000000e+00> : vector<8x8xf32>
      %146 = tpu.matmul %143, %144, %cst_86 {dimension_numbers = #tpu.dot_dimension_numbers<[1], [1], [0], [0], [0, 0, 1, 0], [], []>} : vector<8x8xf32>, vector<8x8xf32>, vector<8x8xf32> -> vector<8x8xf32>
      %cst_87 = arith.constant 0.353553385 : f32
      %147 = vector.broadcast %cst_87 : f32 to vector<8x8xf32>
      %148 = arith.mulf %146, %147 : vector<8x8xf32>
      %cst_88 = arith.constant 0xFF800000 : f32
      %149 = vector.broadcast %cst_88 : f32 to vector<8x8xf32>
      %150 = arith.select %25, %148, %149 : vector<8x8xi1>, vector<8x8xf32>
      %c3 = arith.constant 3 : index
      %c0_89 = arith.constant 0 : index
      %c0_90 = arith.constant 0 : index
      %151 = vector.load %arg7[%c3, %c0_89, %c0_90] : memref<4x8x1xf32, #tpu.memory_space<vmem>>, vector<1x8x1xf32>
      %152 = vector.shape_cast %151 : vector<1x8x1xf32> to vector<8x1xf32>
      %cst_91 = arith.constant dense<0xFF800000> : vector<8xf32>
      %153 = vector.multi_reduction <maximumf>, %150, %cst_91 [1] : vector<8x8xf32> to vector<8xf32>
      %154 = vector.shape_cast %153 : vector<8xf32> to vector<8x1xf32>
      %155 = arith.maximumf %152, %154 : vector<8x1xf32>
      %156 = arith.subf %152, %155 : vector<8x1xf32>
      %157 = math.exp %156 : vector<8x1xf32>
      %158 = vector.broadcast %155 : vector<8x1xf32> to vector<8x8xf32>
      %159 = arith.subf %150, %158 : vector<8x8xf32>
      %160 = math.exp %159 : vector<8x8xf32>
      %c3_92 = arith.constant 3 : index
      %c0_93 = arith.constant 0 : index
      %c0_94 = arith.constant 0 : index
      %161 = vector.load %arg8[%c3_92, %c0_93, %c0_94] : memref<4x8x1xf32, #tpu.memory_space<vmem>>, vector<1x8x1xf32>
      %162 = vector.shape_cast %161 : vector<1x8x1xf32> to vector<8x1xf32>
      %163 = arith.mulf %157, %162 : vector<8x1xf32>
      %cst_95 = arith.constant dense<0.000000e+00> : vector<8xf32>
      %164 = vector.multi_reduction <add>, %160, %cst_95 [1] : vector<8x8xf32> to vector<8xf32>
      %165 = vector.shape_cast %164 : vector<8xf32> to vector<8x1xf32>
      %166 = arith.addf %163, %165 : vector<8x1xf32>
      %c3_96 = arith.constant 3 : index
      %c0_97 = arith.constant 0 : index
      %c0_98 = arith.constant 0 : index
      %167 = vector.load %arg8[%c3_96, %c0_97, %c0_98] : memref<4x8x1xf32, #tpu.memory_space<vmem>>, vector<1x8x1xf32>
      %168 = vector.shape_cast %167 : vector<1x8x1xf32> to vector<8x1xf32>
      %169 = vector.shape_cast %166 : vector<8x1xf32> to vector<1x8x1xf32>
      tpu.vector_store %arg8[%c3_96, %c0_97, %c0_98], %169 {strides = array<i32>} : memref<4x8x1xf32, #tpu.memory_space<vmem>>, vector<1x8x1xf32>,
      %c3_99 = arith.constant 3 : index
      %c0_100 = arith.constant 0 : index
      %c0_101 = arith.constant 0 : index
      %170 = vector.load %arg9[%c3_99, %c0_100, %c0_101] : memref<4x8x8xf32, #tpu.memory_space<vmem>>, vector<1x8x8xf32>
      %171 = vector.shape_cast %170 : vector<1x8x8xf32> to vector<8x8xf32>
      %172 = vector.broadcast %157 : vector<8x1xf32> to vector<8x8xf32>
      %173 = arith.mulf %172, %171 : vector<8x8xf32>
      %cst_102 = arith.constant dense<0.000000e+00> : vector<8x8xf32>
      %174 = tpu.matmul %160, %145, %cst_102 {dimension_numbers = #tpu.dot_dimension_numbers<[1], [0], [0], [1], [0, 0, 1, 1], [], []>} : vector<8x8xf32>, vector<8x8xf32>, vector<8x8xf32> -> vector<8x8xf32>
      %175 = arith.addf %173, %174 : vector<8x8xf32>
      %c3_103 = arith.constant 3 : index
      %c0_104 = arith.constant 0 : index
      %c0_105 = arith.constant 0 : index
      %176 = vector.load %arg9[%c3_103, %c0_104, %c0_105] : memref<4x8x8xf32, #tpu.memory_space<vmem>>, vector<1x8x8xf32>
      %177 = vector.shape_cast %176 : vector<1x8x8xf32> to vector<8x8xf32>
      %178 = vector.shape_cast %175 : vector<8x8xf32> to vector<1x8x8xf32>
      tpu.vector_store %arg9[%c3_103, %c0_104, %c0_105], %178 {strides = array<i32>} : memref<4x8x8xf32, #tpu.memory_space<vmem>>, vector<1x8x8xf32>,
      %c3_106 = arith.constant 3 : index
      %c0_107 = arith.constant 0 : index
      %c0_108 = arith.constant 0 : index
      %179 = vector.load %arg7[%c3_106, %c0_107, %c0_108] : memref<4x8x1xf32, #tpu.memory_space<vmem>>, vector<1x8x1xf32>
      %180 = vector.shape_cast %179 : vector<1x8x1xf32> to vector<8x1xf32>
      %181 = vector.shape_cast %155 : vector<8x1xf32> to vector<1x8x1xf32>
      tpu.vector_store %arg7[%c3_106, %c0_107, %c0_108], %181 {strides = array<i32>} : memref<4x8x1xf32, #tpu.memory_space<vmem>>, vector<1x8x1xf32>,
    } else {
    }
    %c0_i32_4 = arith.constant 0 : i32
    %10 = arith.cmpi eq, %arg2, %c0_i32_4 : i32
    %11 = arith.extui %10 : i1 to i32
    %c0_i32_5 = arith.constant 0 : i32
    %12 = arith.cmpi ne, %11, %c0_i32_5 : i32
    scf.if %12 {
      %c0 = arith.constant 0 : index
      %c0_6 = arith.constant 0 : index
      %c0_7 = arith.constant 0 : index
      %13 = vector.load %arg9[%c0, %c0_6, %c0_7] : memref<4x8x8xf32, #tpu.memory_space<vmem>>, vector<1x8x8xf32>
      %14 = vector.shape_cast %13 : vector<1x8x8xf32> to vector<8x8xf32>
      %c0_8 = arith.constant 0 : index
      %c0_9 = arith.constant 0 : index
      %c0_10 = arith.constant 0 : index
      %15 = vector.load %arg8[%c0_8, %c0_9, %c0_10] : memref<4x8x1xf32, #tpu.memory_space<vmem>>, vector<1x8x1xf32>
      %16 = vector.shape_cast %15 : vector<1x8x1xf32> to vector<8x1xf32>
      %17 = tpu.reciprocal %16 {approx = true} : vector<8x1xf32> -> vector<8x1xf32>
      %18 = vector.broadcast %17 : vector<8x1xf32> to vector<8x8xf32>
      %19 = arith.mulf %14, %18 : vector<8x8xf32>
      %c1 = arith.constant 1 : index
      %c0_11 = arith.constant 0 : index
      %c0_12 = arith.constant 0 : index
      %20 = vector.load %arg9[%c1, %c0_11, %c0_12] : memref<4x8x8xf32, #tpu.memory_space<vmem>>, vector<1x8x8xf32>
      %21 = vector.shape_cast %20 : vector<1x8x8xf32> to vector<8x8xf32>
      %c1_13 = arith.constant 1 : index
      %c0_14 = arith.constant 0 : index
      %c0_15 = arith.constant 0 : index
      %22 = vector.load %arg8[%c1_13, %c0_14, %c0_15] : memref<4x8x1xf32, #tpu.memory_space<vmem>>, vector<1x8x1xf32>
      %23 = vector.shape_cast %22 : vector<1x8x1xf32> to vector<8x1xf32>
      %24 = tpu.reciprocal %23 {approx = true} : vector<8x1xf32> -> vector<8x1xf32>
      %25 = vector.broadcast %24 : vector<8x1xf32> to vector<8x8xf32>
      %26 = arith.mulf %21, %25 : vector<8x8xf32>
      %c2 = arith.constant 2 : index
      %c0_16 = arith.constant 0 : index
      %c0_17 = arith.constant 0 : index
      %27 = vector.load %arg9[%c2, %c0_16, %c0_17] : memref<4x8x8xf32, #tpu.memory_space<vmem>>, vector<1x8x8xf32>
      %28 = vector.shape_cast %27 : vector<1x8x8xf32> to vector<8x8xf32>
      %c2_18 = arith.constant 2 : index
      %c0_19 = arith.constant 0 : index
      %c0_20 = arith.constant 0 : index
      %29 = vector.load %arg8[%c2_18, %c0_19, %c0_20] : memref<4x8x1xf32, #tpu.memory_space<vmem>>, vector<1x8x1xf32>
      %30 = vector.shape_cast %29 : vector<1x8x1xf32> to vector<8x1xf32>
      %31 = tpu.reciprocal %30 {approx = true} : vector<8x1xf32> -> vector<8x1xf32>
      %32 = vector.broadcast %31 : vector<8x1xf32> to vector<8x8xf32>
      %33 = arith.mulf %28, %32 : vector<8x8xf32>
      %c3 = arith.constant 3 : index
      %c0_21 = arith.constant 0 : index
      %c0_22 = arith.constant 0 : index
      %34 = vector.load %arg9[%c3, %c0_21, %c0_22] : memref<4x8x8xf32, #tpu.memory_space<vmem>>, vector<1x8x8xf32>
      %35 = vector.shape_cast %34 : vector<1x8x8xf32> to vector<8x8xf32>
      %c3_23 = arith.constant 3 : index
      %c0_24 = arith.constant 0 : index
      %c0_25 = arith.constant 0 : index
      %36 = vector.load %arg8[%c3_23, %c0_24, %c0_25] : memref<4x8x1xf32, #tpu.memory_space<vmem>>, vector<1x8x1xf32>
      %37 = vector.shape_cast %36 : vector<1x8x1xf32> to vector<8x1xf32>
      %38 = tpu.reciprocal %37 {approx = true} : vector<8x1xf32> -> vector<8x1xf32>
      %39 = vector.broadcast %38 : vector<8x1xf32> to vector<8x8xf32>
      %40 = arith.mulf %35, %39 : vector<8x8xf32>
      %41 = tpu.concatenate %19, %26, %33, %40 in 1 : vector<8x8xf32>, vector<8x8xf32>, vector<8x8xf32>, vector<8x8xf32> -> vector<8x32xf32>
      %c0_26 = arith.constant 0 : index
      %c0_27 = arith.constant 0 : index
      %c0_28 = arith.constant 0 : index
      %42 = vector.load %arg6[%c0_26, %c0_27, %c0_28] : memref<1x8x32xf32, #tpu.memory_space<vmem>>, vector<1x8x32xf32>
      %43 = vector.shape_cast %42 : vector<1x8x32xf32> to vector<8x32xf32>
      %44 = vector.shape_cast %41 : vector<8x32xf32> to vector<1x8x32xf32>
      tpu.vector_store %arg6[%c0_26, %c0_27, %c0_28], %44 {strides = array<i32>} : memref<1x8x32xf32, #tpu.memory_space<vmem>>, vector<1x8x32xf32>,
    } else {
    }
    return
  }
  func.func @transform_0(%arg0: i32, %arg1: i32, %arg2: i32) -> (i32, i32, i32, i32) {
    %c0_i32 = arith.constant 0 : i32
    %c0_i32_0 = arith.constant 0 : i32
    %c0_i32_1 = arith.constant 0 : i32
    return %c0_i32, %arg0, %arg1, %c0_i32_0 : i32, i32, i32, i32
  }
  func.func @transform_1(%arg0: i32, %arg1: i32, %arg2: i32) -> (i32, i32, i32, i32) {
    %c1_i32 = arith.constant 1 : i32
    %c0_i32 = arith.constant 0 : i32
    %c0_i32_0 = arith.constant 0 : i32
    return %c1_i32, %arg0, %arg2, %c0_i32 : i32, i32, i32, i32
  }
  func.func @transform_2(%arg0: i32, %arg1: i32, %arg2: i32) -> (i32, i32, i32, i32) {
    %c2_i32 = arith.constant 2 : i32
    %c0_i32 = arith.constant 0 : i32
    %c0_i32_0 = arith.constant 0 : i32
    return %c2_i32, %arg0, %arg2, %c0_i32 : i32, i32, i32, i32
  }
  func.func @transform_3(%arg0: i32, %arg1: i32, %arg2: i32) -> (i32, i32, i32) {
    %c0_i32 = arith.constant 0 : i32
    %c0_i32_0 = arith.constant 0 : i32
    return %arg0, %arg1, %c0_i32 : i32, i32, i32
  }
}

</mosaic_0001>

<llo_original>
// kernel: causal_self_attention.3
$region0: #{causal_self_attention.3}
  #allocation0 [shape = 'u32[]', space=smem, size = 0x4, offset = 0x4, fixed_abs, tag = 'smem constant byte address 0x4 - core index']
  #allocation1 [shape = 'u32[144,128]{1,0:T(1,128)}', space=vmem, size = 0x12000, scoped, tag = 'internal scratch']
  #allocation2 [shape = 'f32[16,32]{1,0:T(8,128)}', space=vmem, size = 0x2000, scoped, tag = 'scratch operand']
  %s0 = inlined_call_operand.vmem [shape: f32[16,32], index: 0, kind: input, shape index: {}]
  %s1 = inlined_call_operand.vmem [shape: f32[3,32,32], index: 1, kind: input, shape index: {}]
  %s2 = inlined_call_operand.vmem [shape: f32[3,1,32], index: 2, kind: input, shape index: {}]
  %s3 = inlined_call_operand.vmem [shape: f32[3,16,32], index: 3, kind: output, shape index: {}]
  %s4 = sld [smem:[#allocation0]]
  $region53: #{causal_self_attention.3} parent=0
    _
  %s6 = ssub.s32 1, %s4
  %s7 = scalar_select 0, %s6, %s4
  loop: start=0, step=1, limit=5
  $region2: #{causal_self_attention.3} parent=0 // loop_pre_header
    _
  $region3: #{causal_self_attention.3} parent=0 // loop_header
    %s9 = sphi 0, %s13
    %p10 = scmp.ge.s32.totalorder %s9, 5
    %s16 = sphi 0, %s42
    %s17 = sphi 0, %s38
    %s18 = sphi 0, %s34
    %s19 = sphi 0, %s30
    %s20 = sphi 0, %s16
    %s21 = sphi 0, %s17
    %s22 = sphi 0, %s18
    %s23 = sphi 0, %s19
    %s24 = sphi 0, %s20
    %s25 = sphi 0, %s21
    %s26 = sphi 0, %s22
    %s27 = sphi 0, %s23
    %s47 = sphi 0, %s49
    %s50 = sphi 0, %s47
    %s51 = sphi 0, %s50
    %s67 = sphi 0, %s51
    %s77 = sphi 0, %s79
    %s80 = sphi 0, %s77
    %s81 = sphi 0, %s80
    %s97 = sphi 0, %s81
    %s105 = sphi 0, %s107
    %s108 = sphi 0, %s105
    %s109 = sphi 0, %s108
    %s125 = sphi 0, %s109
    %s135 = sphi 0, %s137
    %s138 = sphi 0, %s135
    %s139 = sphi 0, %s138
    %s155 = sphi 0, %s139
  $region4: #{causal_self_attention.3} parent=0 // loop_header_branch
    %12 = sbr.rel (%p10) target = $region8
  $region5: #{causal_self_attention.3} parent=0 // loop_body
    %s14 = ssub.s32 %s9, 1
    %s15 = ssub.s32 %s9, 2
    %s28 = sadd.s32 1, %s19
    %p29 = scmp.ge.s32.totalorder %s28, 1
    %s30 = scalar_select %p29, 0, %s28
    %s31 = sadd.s32 1, %s18
    %s32 = scalar_select %p29, %s31, %s18
    %p33 = scmp.ge.s32.totalorder %s32, 1
    %s34 = scalar_select %p33, 0, %s32
    %s35 = sadd.s32 1, %s17
    %s36 = scalar_select %p33, %s35, %s17
    %p37 = scmp.ge.s32.totalorder %s36, 1
    %s38 = scalar_select %p37, 0, %s36
    %s39 = sadd.s32 1, %s16
    %s40 = scalar_select %p37, %s39, %s16
    %p41 = scmp.ge.s32.totalorder %s40, 3
    %s42 = scalar_select %p41, 0, %s40
    %s43 = ssub.s32 %s17, %s38
    %s44 = ssub.s32 %s19, %s30
    %s45 = sor.u32 %s43, %s44
    %p46 = scmp.eq.s32.totalorder %s45, 0
    %s48 = sadd.s32 %s47, 1
    %s49 = scalar_select %p46, %s47, %s48
    %p52 = pneg %p46
    %p53 = scmp.eq.s32.totalorder %s9, 2
    %p54 = por %p52, %p53
    %p55 = scmp.ne.s32.totalorder %s47, %s50
    %p56 = scmp.eq.s32.totalorder %s9, 0
    %p57 = por %p55, %p56
    %p58 = scmp.ne.s32.totalorder %s47, %s50
    %p59 = scmp.eq.s32.totalorder %s14, 2
    %p60 = por %p58, %p59
    %p61 = scmp.ne.s32.totalorder %s50, %s51
    %p62 = scmp.eq.s32.totalorder %s14, 0
    %p63 = por %p61, %p62
    %p64 = scmp.ne.s32.totalorder %s50, %s51
    %p65 = scmp.eq.s32.totalorder %s15, 2
    %p66 = por %p64, %p65
    %p68 = scmp.ne.s32.totalorder %s51, %s67
    %p69 = scmp.eq.s32.totalorder %s15, 0
    %p70 = por %p68, %p69
    %s71 = ssub.s32 %s16, %s42
    %s72 = ssub.s32 %s19, %s30
    %s73 = sor.u32 %s71, %s72
    %s74 = ssub.s32 %s18, %s34
    %s75 = sor.u32 %s73, %s74
    %p76 = scmp.eq.s32.totalorder %s75, 0
    %s78 = sadd.s32 %s77, 1
    %s79 = scalar_select %p76, %s77, %s78
    %p82 = pneg %p76
    %p83 = scmp.eq.s32.totalorder %s9, 2
    %p84 = por %p82, %p83
    %p85 = scmp.ne.s32.totalorder %s77, %s80
    %p86 = scmp.eq.s32.totalorder %s9, 0
    %p87 = por %p85, %p86
    %p88 = scmp.ne.s32.totalorder %s77, %s80
    %p89 = scmp.eq.s32.totalorder %s14, 2
    %p90 = por %p88, %p89
    %p91 = scmp.ne.s32.totalorder %s80, %s81
    %p92 = scmp.eq.s32.totalorder %s14, 0
    %p93 = por %p91, %p92
    %p94 = scmp.ne.s32.totalorder %s80, %s81
    %p95 = scmp.eq.s32.totalorder %s15, 2
    %p96 = por %p94, %p95
    %p98 = scmp.ne.s32.totalorder %s81, %s97
    %p99 = scmp.eq.s32.totalorder %s15, 0
    %p100 = por %p98, %p99
    %s101 = ssub.s32 %s16, %s42
    %s102 = ssub.s32 %s18, %s34
    %s103 = sor.u32 %s101, %s102
    %p104 = scmp.eq.s32.totalorder %s103, 0
    %s106 = sadd.s32 %s105, 1
    %s107 = scalar_select %p104, %s105, %s106
    %p110 = pneg %p104
    %p111 = scmp.eq.s32.totalorder %s9, 2
    %p112 = por %p110, %p111
    %p113 = scmp.ne.s32.totalorder %s105, %s108
    %p114 = scmp.eq.s32.totalorder %s9, 0
    %p115 = por %p113, %p114
    %p116 = scmp.ne.s32.totalorder %s105, %s108
    %p117 = scmp.eq.s32.totalorder %s14, 2
    %p118 = por %p116, %p117
    %p119 = scmp.ne.s32.totalorder %s108, %s109
    %p120 = scmp.eq.s32.totalorder %s14, 0
    %p121 = por %p119, %p120
    %p122 = scmp.ne.s32.totalorder %s108, %s109
    %p123 = scmp.eq.s32.totalorder %s15, 2
    %p124 = por %p122, %p123
    %p126 = scmp.ne.s32.totalorder %s109, %s125
    %p127 = scmp.eq.s32.totalorder %s15, 0
    %p128 = por %p126, %p127
    %s129 = ssub.s32 %s16, %s42
    %s130 = ssub.s32 %s17, %s38
    %s131 = sor.u32 %s129, %s130
    %s132 = ssub.s32 %s18, %s34
    %s133 = sor.u32 %s131, %s132
    %p134 = scmp.eq.s32.totalorder %s133, 0
    %s136 = sadd.s32 %s135, 1
    %s137 = scalar_select %p134, %s135, %s136
    %p140 = pneg %p134
    %p141 = scmp.eq.s32.totalorder %s9, 2
    %p142 = por %p140, %p141
    %p143 = scmp.ne.s32.totalorder %s135, %s138
    %p144 = scmp.eq.s32.totalorder %s9, 0
    %p145 = por %p143, %p144
    %p146 = scmp.ne.s32.totalorder %s135, %s138
    %p147 = scmp.eq.s32.totalorder %s14, 2
    %p148 = por %p146, %p147
    %p149 = scmp.ne.s32.totalorder %s138, %s139
    %p150 = scmp.eq.s32.totalorder %s14, 0
    %p151 = por %p149, %p150
    %p152 = scmp.ne.s32.totalorder %s138, %s139
    %p153 = scmp.eq.s32.totalorder %s15, 2
    %p154 = por %p152, %p153
    %p156 = scmp.ne.s32.totalorder %s139, %s155
    %p157 = scmp.eq.s32.totalorder %s15, 0
    %p158 = por %p156, %p157
    %p159 = scmp.le.s32.totalorder 1, %s9
    %p160 = scmp.lt.s32.totalorder %s9, 4
    %p161 = pnand %p159, %p160
    %p162 = pneg %p161
    // Predicated region
    $region9: #{causal_self_attention.3} parent=5 // pred_check
      _
    $region10: #{causal_self_attention.3} parent=5 // pred_check_branch
      %164 = sbr.rel (%p161) target = $region12
    $region11: #{causal_self_attention.3} parent=5 // pred_region
      %s165 = ssub.s32 %s9, 1
      // Predicated region
      $region13: #{causal_self_attention.3} parent=11 // pred_check
        %p166 = pneg %p63
      $region14: #{causal_self_attention.3} parent=11 // pred_check_branch
        %168 = sbr.rel (%p166) target = $region16
      $region15: #{causal_self_attention.3} parent=11 // pred_region
        %s169 = smul.u32 2, %s21
        %p170 = scmp.lt.s32.totalorder %s169, 1
        %s171 = scalar_select %p170, %s169, 1
        %p172 = scmp.lt.s32.totalorder %s23, 0
        %s173 = scalar_select %p172, %s23, 0
        %s174 = sadd.s32 %s173, %s171
        %s175 = smul.addr %s174, 8
        %s176 = scalar_lea.vmem %s0, %s175
        %s177 = smul.u32 2, %s21
      $region16: #{causal_self_attention.3} parent=11 // pred_fallthru
        _
    $region12: #{causal_self_attention.3} parent=5 // pred_fallthru
      _
    %p178 = scmp.lt.s32.totalorder %s9, 3
    // Predicated region
    $region17: #{causal_self_attention.3} parent=5 // pred_check
      %p179 = pneg %p178
    $region18: #{causal_self_attention.3} parent=5 // pred_check_branch
      %181 = sbr.rel (%p179) target = $region20
    $region19: #{causal_self_attention.3} parent=5 // pred_region
      // Predicated region
      $region21: #{causal_self_attention.3} parent=19 // pred_check
        %p182 = pneg %p87
      $region22: #{causal_self_attention.3} parent=19 // pred_check_branch
        %184 = sbr.rel (%p182) target = $region24
      $region23: #{causal_self_attention.3} parent=19 // pred_region
        %s185 = smul.u32 4, %s19
        %p186 = scmp.lt.s32.totalorder %s16, 2
        %s187 = scalar_select %p186, %s16, 2
        %p188 = scmp.lt.s32.totalorder %s185, 3
        %s189 = scalar_select %p188, %s185, 3
        %p190 = scmp.lt.s32.totalorder %s18, 0
        %s191 = scalar_select %p190, %s18, 0
        %s192 = sadd.s32 %s191, %s189
        %s193 = smul.addr %s187, 4
        %s194 = sadd.s32 %s192, %s193
        %s195 = smul.addr %s194, 8
        %s196 = scalar_lea.vmem %s1, %s195
        %s197 = smul.u32 4, %s19
      $region24: #{causal_self_attention.3} parent=19 // pred_fallthru
        _
      // Predicated region
      $region25: #{causal_self_attention.3} parent=19 // pred_check
        %p198 = pneg %p115
      $region26: #{causal_self_attention.3} parent=19 // pred_check_branch
        %200 = sbr.rel (%p198) target = $region28
      $region27: #{causal_self_attention.3} parent=19 // pred_region
        %p201 = scmp.lt.s32.totalorder %s16, 2
        %s202 = scalar_select %p201, %s16, 2
        %p203 = scmp.lt.s32.totalorder %s18, 0
        %s204 = scalar_select %p203, %s18, 0
        %s205 = sadd.s32 %s204, %s202
        %s206 = scalar_lea.vmem %s2, %s205
      $region28: #{causal_self_attention.3} parent=19 // pred_fallthru
        _
    $region20: #{causal_self_attention.3} parent=5 // pred_fallthru
      _
    %p207 = scmp.le.s32.totalorder 1, %s9
    %p208 = scmp.lt.s32.totalorder %s9, 4
    %p209 = pnand %p207, %p208
    %p210 = pneg %p209
    // Predicated region
    $region29: #{causal_self_attention.3} parent=5 // pred_check
      _
    $region30: #{causal_self_attention.3} parent=5 // pred_check_branch
      %212 = sbr.rel (%p209) target = $region32
    $region31: #{causal_self_attention.3} parent=5 // pred_region
      %s213 = ssub.s32 %s9, 1
      %s214 = smul.u32 2, %s21
      %p215 = scmp.lt.s32.totalorder %s214, 1
      %s216 = scalar_select %p215, %s214, 1
      %p217 = scmp.lt.s32.totalorder %s23, 0
      %s218 = scalar_select %p217, %s23, 0
      %s219 = sadd.s32 %s218, %s216
      %s220 = smul.addr %s219, 8
      %s221 = scalar_lea.vmem %s0, %s220
      %p222 = pneg %p63
      %p223 = pneg %p60
      %s224 = smul.u32 4, %s23
      %p225 = scmp.lt.s32.totalorder %s20, 2
      %s226 = scalar_select %p225, %s20, 2
      %p227 = scmp.lt.s32.totalorder %s224, 3
      %s228 = scalar_select %p227, %s224, 3
      %p229 = scmp.lt.s32.totalorder %s22, 0
      %s230 = scalar_select %p229, %s22, 0
      %s231 = sadd.s32 %s230, %s228
      %s232 = smul.addr %s226, 4
      %s233 = sadd.s32 %s231, %s232
      %s234 = smul.addr %s233, 8
      %s235 = scalar_lea.vmem %s1, %s234
      %p236 = pneg %p93
      %p237 = pneg %p90
      %p238 = scmp.lt.s32.totalorder %s20, 2
      %s239 = scalar_select %p238, %s20, 2
      %p240 = scmp.lt.s32.totalorder %s22, 0
      %s241 = scalar_select %p240, %s22, 0
      %s242 = sadd.s32 %s241, %s239
      %s243 = scalar_lea.vmem %s2, %s242
      %p244 = pneg %p121
      %p245 = pneg %p118
      %p246 = pneg %p151
      %p247 = pneg %p148
      %s248 = smul.u32 2, %s21
      %p249 = scmp.lt.s32.totalorder %s20, 2
      %s250 = scalar_select %p249, %s20, 2
      %p251 = scmp.lt.s32.totalorder %s248, 1
      %s252 = scalar_select %p251, %s248, 1
      %p253 = scmp.lt.s32.totalorder %s22, 0
      %s254 = scalar_select %p253, %s22, 0
      %s255 = sadd.s32 %s254, %s252
      %s256 = smul.addr %s250, 2
      %s257 = sadd.s32 %s255, %s256
      %s258 = smul.addr %s257, 8
      %s259 = scalar_lea.vmem %s3, %s258
      %s260 = smul.u32 2, %s21
      %p261 = scmp.lt.s32.totalorder %s260, 1
      %s262 = scalar_select %p261, %s260, 1
      %p263 = scmp.lt.s32.totalorder %s23, 0
      %s264 = scalar_select %p263, %s23, 0
      %s265 = sadd.s32 %s264, %s262
      %s266 = smul.addr %s265, 8
      %s267 = scalar_lea.vmem %s0, %s266
      %s268 = smul.u32 2, %s21
      %s269 = smul.u32 4, %s23
      %p270 = scmp.lt.s32.totalorder %s20, 2
      %s271 = scalar_select %p270, %s20, 2
      %p272 = scmp.lt.s32.totalorder %s269, 3
      %s273 = scalar_select %p272, %s269, 3
      %p274 = scmp.lt.s32.totalorder %s22, 0
      %s275 = scalar_select %p274, %s22, 0
      %s276 = sadd.s32 %s275, %s273
      %s277 = smul.addr %s271, 4
      %s278 = sadd.s32 %s276, %s277
      %s279 = smul.addr %s278, 8
      %s280 = scalar_lea.vmem %s1, %s279
      %s281 = smul.u32 4, %s23
      %p282 = scmp.lt.s32.totalorder %s20, 2
      %s283 = scalar_select %p282, %s20, 2
      %p284 = scmp.lt.s32.totalorder %s22, 0
      %s285 = scalar_select %p284, %s22, 0
      %s286 = sadd.s32 %s285, %s283
      %s287 = scalar_lea.vmem %s2, %s286
      %s288 = smul.u32 2, %s21
      %p289 = scmp.lt.s32.totalorder %s20, 2
      %s290 = scalar_select %p289, %s20, 2
      %p291 = scmp.lt.s32.totalorder %s288, 1
      %s292 = scalar_select %p291, %s288, 1
      %p293 = scmp.lt.s32.totalorder %s22, 0
      %s294 = scalar_select %p293, %s22, 0
      %s295 = sadd.s32 %s294, %s292
      %s296 = smul.addr %s290, 2
      %s297 = sadd.s32 %s295, %s296
      %s298 = smul.addr %s297, 8
      %s299 = scalar_lea.vmem %s3, %s298
      %s300 = smul.u32 2, %s21
      %p301 = scmp.eq.s32.totalorder %s23, 0
      // Predicated region
      $region33: #{causal_self_attention.3} parent=31 // pred_check
        %p302 = pneg %p301
      $region34: #{causal_self_attention.3} parent=31 // pred_check_branch
        %304 = sbr.rel (%p302) target = $region36
      $region35: #{causal_self_attention.3} parent=31 // pred_region
        %vm305 = vcmask 261120
        %306 = vst.msk [vmem:[#allocation2] sm:$0xff] %vm305, 0.0
        %307 = vst.msk [vmem:[#allocation2 + $0x8] sm:$0xff] %vm305, 0.0
      $region36: #{causal_self_attention.3} parent=31 // pred_fallthru
        _
      %v308 = vld [vmem:[#allocation2] sm:$0xff]
      %v309 = vld [vmem:[#allocation2 + $0x8] sm:$0xff]
      %v310 = vld [vmem:[%s267] sm:$0xff]
      %v311 = vld [vmem:[%s267 + $0x8] sm:$0xff]
      %v312 = vld [vmem:[%s280] sm:$0xff]
      %v313 = vld [vmem:[%s280 + $0x8] sm:$0xff]
      %v314 = vld [vmem:[%s280 + $0x10] sm:$0xff]
      %v315 = vld [vmem:[%s280 + $0x18] sm:$0xff]
      %vm316 = vcmask 261120
      %v318 = vsel %vm316, %v310, 0
      %v321 = vsel %vm316, %v311, 0
      %323 = vmatprep.subr.mxu0 0.0
      %324 = vmatpush1.msra.mxu0 %v312
      %325 = vmatprep.subr.mxu0 0.0
      %326 = vmatpush1.msra.mxu0 %v313
      %327 = vmatprep.subr.mxu0 0.0
      %328 = vmatpush1.msra.mxu0 %v314
      %329 = vmatprep.subr.mxu0 0.0
      %330 = vmatpush1.msra.mxu0 %v315
      %331 = vmatprep.subr.mxu0 0.0
      %332 = vmatpush1.msra.mxu0 0.0
      %333 = vmatprep.subr.mxu0 0.0
      %334 = vmatpush1.msra.mxu0 0.0
      %335 = vmatprep.subr.mxu0 0.0
      %336 = vmatpush1.msra.mxu0 0.0
      %337 = vmatprep.subr.mxu0 0.0
      %338 = vmatpush1.msra.mxu0 0.0
      %339 = vmatprep.subr.mxu0 0.0
      %340 = vmatpush1.msra.mxu0 0.0
      %341 = vmatprep.subr.mxu0 0.0
      %342 = vmatpush1.msra.mxu0 0.0
      %343 = vmatprep.subr.mxu0 0.0
      %344 = vmatpush1.msra.mxu0 0.0
      %345 = vmatprep.subr.mxu0 0.0
      %346 = vmatpush1.msra.mxu0 0.0
      %347 = vmatprep.subr.mxu0 0.0
      %348 = vmatpush1.msra.mxu0 0.0
      %349 = vmatprep.subr.mxu0 0.0
      %350 = vmatpush1.msra.mxu0 0.0
      %351 = vmatprep.subr.mxu0 0.0
      %352 = vmatpush1.msra.mxu0 0.0
      %353 = vmatprep.subr.mxu0 0.0
      %354 = vmatpush1.msra.mxu0 0.0
      %355 = vmatprep.subr.mxu0 0.0
      %356 = vmatpush1.msra.mxu0 0.0
      %357 = vmatprep.subr.mxu0 0.0
      %358 = vmatpush1.msra.mxu0 0.0
      %359 = vmatprep.subr.mxu0 0.0
      %360 = vmatpush1.msra.mxu0 0.0
      %361 = vmatprep.subr.mxu0 0.0
      %362 = vmatpush1.msra.mxu0 0.0
      %363 = vmatprep.subr.mxu0 0.0
      %364 = vmatpush1.msra.mxu0 0.0
      %365 = vmatprep.subr.mxu0 0.0
      %366 = vmatpush1.msra.mxu0 0.0
      %367 = vmatprep.subr.mxu0 0.0
      %368 = vmatpush1.msra.mxu0 0.0
      %369 = vmatprep.subr.mxu0 0.0
      %370 = vmatpush1.msra.mxu0 0.0
      %371 = vmatprep.subr.mxu0 0.0
      %372 = vmatpush1.msra.mxu0 0.0
      %373 = vmatprep.subr.mxu0 0.0
      %374 = vmatpush1.msra.mxu0 0.0
      %375 = vmatprep.subr.mxu0 0.0
      %376 = vmatpush1.msra.mxu0 0.0
      %377 = vmatprep.subr.mxu0 0.0
      %378 = vmatpush1.msra.mxu0 0.0
      %379 = vmatprep.subr.mxu0 0.0
      %380 = vmatpush1.msra.mxu0 0.0
      %381 = vmatprep.subr.mxu0 0.0
      %382 = vmatpush1.msra.mxu0 0.0
      %383 = vmatprep.subr.mxu0 0.0
      %384 = vmatpush1.msra.mxu0 0.0
      %385 = vmatprep.subr.mxu0 0.0
      %386 = vmatpush1.msra.mxu0 0.0
      %387 = vmatprep.mubr.f32.mxu0 0.0
      %388 = vmatmul.mubr.f32.gmra.mrb[0].mxu0 %v318
      %v389 = vpop.f32.mrb[0].mxu0
      %v390 = vadd.f32 0.0, %v389
      %v391 = vpop.f32.mrb[0].mxu0
      %392 = vmatprep.mubr.f32.mxu0 0.0
      %393 = vmatmul.mubr.f32.gmra.mrb[0].mxu0 %v321
      %v394 = vpop.f32.mrb[0].mxu0
      %v395 = vadd.f32 0.0, %v394
      %v396 = vpop.f32.mrb[0].mxu0
      %397 = vdwg.mxu0
      %v398 = vadd.f32 %v308, %v390
      %v399 = vadd.f32 %v309, %v395
      %400 = vst.msk [vmem:[#allocation2] sm:$0xff] %vm316, %v398
      %401 = vst.msk [vmem:[#allocation2 + $0x8] sm:$0xff] %vm316, %v399
      // Predicated region
      $region37: #{causal_self_attention.3} parent=31 // pred_check
        %p402 = pneg %p301
      $region38: #{causal_self_attention.3} parent=31 // pred_check_branch
        %404 = sbr.rel (%p402) target = $region40
      $region39: #{causal_self_attention.3} parent=31 // pred_region
        %v405 = vld [vmem:[#allocation2] sm:$0xff]
        %v406 = vld [vmem:[#allocation2 + $0x8] sm:$0xff]
        %v407 = vld [vmem:[%s287] sm:$0x1]
        %v409 = vlaneseq
        %v410 = vshrl.u32 %v409, 7
        %v411 = vsub.s32 0, %v410
        %v412 = vrot.slane %v407, %v411
        %v414 = vadd.f32 %v405, %v412
        %v415 = vadd.f32 %v406, %v412
        %416 = vst.msk [vmem:[%s299] sm:$0xff] %vm316, %v414
        %417 = vst.msk [vmem:[%s299 + $0x8] sm:$0xff] %vm316, %v415
      $region40: #{causal_self_attention.3} parent=31 // pred_fallthru
        _
      %s418 = smul.u32 2, %s21
      %p419 = scmp.lt.s32.totalorder %s20, 2
      %s420 = scalar_select %p419, %s20, 2
      %p421 = scmp.lt.s32.totalorder %s418, 1
      %s422 = scalar_select %p421, %s418, 1
      %p423 = scmp.lt.s32.totalorder %s22, 0
      %s424 = scalar_select %p423, %s22, 0
      %s425 = sadd.s32 %s424, %s422
      %s426 = smul.addr %s420, 2
      %s427 = sadd.s32 %s425, %s426
      %s428 = smul.addr %s427, 8
      %s429 = scalar_lea.vmem %s3, %s428
      // Predicated region
      $region41: #{causal_self_attention.3} parent=31 // pred_check
        %p430 = pneg %p148
      $region42: #{causal_self_attention.3} parent=31 // pred_check_branch
        %432 = sbr.rel (%p430) target = $region44
      $region43: #{causal_self_attention.3} parent=31 // pred_region
        %s433 = smul.u32 2, %s21
      $region44: #{causal_self_attention.3} parent=31 // pred_fallthru
        _
    $region32: #{causal_self_attention.3} parent=5 // pred_fallthru
      _
    %p434 = scmp.le.s32.totalorder 2, %s9
    // Predicated region
    $region45: #{causal_self_attention.3} parent=5 // pred_check
      %p435 = pneg %p434
    $region46: #{causal_self_attention.3} parent=5 // pred_check_branch
      %437 = sbr.rel (%p435) target = $region48
    $region47: #{causal_self_attention.3} parent=5 // pred_region
      %s438 = ssub.s32 %s9, 2
      // Predicated region
      $region49: #{causal_self_attention.3} parent=47 // pred_check
        %p439 = pneg %p154
      $region50: #{causal_self_attention.3} parent=47 // pred_check_branch
        %441 = sbr.rel (%p439) target = $region52
      $region51: #{causal_self_attention.3} parent=47 // pred_region
        %s442 = smul.u32 2, %s25
        %p443 = scmp.lt.s32.totalorder %s24, 2
        %s444 = scalar_select %p443, %s24, 2
        %p445 = scmp.lt.s32.totalorder %s442, 1
        %s446 = scalar_select %p445, %s442, 1
        %p447 = scmp.lt.s32.totalorder %s26, 0
        %s448 = scalar_select %p447, %s26, 0
        %s449 = sadd.s32 %s448, %s446
        %s450 = smul.addr %s444, 2
        %s451 = sadd.s32 %s449, %s450
        %s452 = smul.addr %s451, 8
        %s453 = scalar_lea.vmem %s3, %s452
      $region52: #{causal_self_attention.3} parent=47 // pred_fallthru
        _
    $region48: #{causal_self_attention.3} parent=5 // pred_fallthru
      _
  $region6: #{causal_self_attention.3} parent=0 // loop_footer
    %s13 = sadd.s32 1, %s9
  $region7: #{causal_self_attention.3} parent=0 // loop_footer_branch
    %8 = sbr.rel target = $region3
  $region8: #{causal_self_attention.3} parent=0 // loop_exit
    _

// kernel: causal_self_attention.5
$region0: #{causal_self_attention.5}
  #allocation0 [shape = 'u32[]', space=smem, size = 0x4, offset = 0x4, fixed_abs, tag = 'smem constant byte address 0x4 - core index']
  #allocation1 [shape = 'u32[144,128]{1,0:T(1,128)}', space=vmem, size = 0x12000, scoped, tag = 'internal scratch']
  #allocation2 [shape = 'f32[16,32]{1,0:T(8,128)}', space=vmem, size = 0x2000, scoped, tag = 'scratch operand']
  %s0 = inlined_call_operand.vmem [shape: f32[16,32], index: 0, kind: input, shape index: {}]
  %s1 = inlined_call_operand.vmem [shape: f32[1,32,32], index: 1, kind: input, shape index: {}]
  %s2 = inlined_call_operand.vmem [shape: f32[1,1,32], index: 2, kind: input, shape index: {}]
  %s3 = inlined_call_operand.hbm [shape: f32[1,16,32], index: 3, kind: output, shape index: {}]
  %s4 = sld [smem:[#allocation0]]
  $region30: #{causal_self_attention.5} parent=0
    _
  %s6 = ssub.s32 1, %s4
  %s7 = scalar_select 0, %s6, %s4
  $region1: #{causal_self_attention.5} parent=0
    #allocation3 [shape = 'u8[8192]{0}', space=vmem, size = 0x2000, scoped, tag = 'output window, operand 0, single buffered']
    #allocation4 [shape = 's32[1]{0}', space=sflag, size = 0x4, scoped, tag = 'scoped memory for causal_self_attention.5']
    %8 = vsyncpa [#allocation4], 0
    // Predicated region
    $region2: #{causal_self_attention.5} parent=1 // pred_check
      _
    $region3: #{causal_self_attention.5} parent=1 // pred_check_branch
      %10 = sbr.rel (0) target = $region5
    $region4: #{causal_self_attention.5} parent=1 // pred_region
      _
    $region5: #{causal_self_attention.5} parent=1 // pred_fallthru
      _
    // Predicated region
    $region6: #{causal_self_attention.5} parent=1 // pred_check
      _
    $region7: #{causal_self_attention.5} parent=1 // pred_check_branch
      %12 = sbr.rel (0) target = $region9
    $region8: #{causal_self_attention.5} parent=1 // pred_region
      _
    $region9: #{causal_self_attention.5} parent=1 // pred_fallthru
      _
    // Predicated region
    $region10: #{causal_self_attention.5} parent=1 // pred_check
      _
    $region11: #{causal_self_attention.5} parent=1 // pred_check_branch
      %14 = sbr.rel (0) target = $region13
    $region12: #{causal_self_attention.5} parent=1 // pred_region
      _
    $region13: #{causal_self_attention.5} parent=1 // pred_fallthru
      _
    %p15 = scmp.eq.s32.totalorder 0, 0
    // Predicated region
    $region14: #{causal_self_attention.5} parent=1 // pred_check
      %p16 = pneg %p15
    $region15: #{causal_self_attention.5} parent=1 // pred_check_branch
      %18 = sbr.rel (%p16) target = $region17
    $region16: #{causal_self_attention.5} parent=1 // pred_region
      %vm19 = vcmask 261120
      %20 = vst.msk [vmem:[#allocation2] sm:$0xff] %vm19, 0.0
      %21 = vst.msk [vmem:[#allocation2 + $0x8] sm:$0xff] %vm19, 0.0
    $region17: #{causal_self_attention.5} parent=1 // pred_fallthru
      _
    %v22 = vld [vmem:[#allocation2] sm:$0xff]
    %v23 = vld [vmem:[#allocation2 + $0x8] sm:$0xff]
    %v24 = vld [vmem:[%s0] sm:$0xff]
    %v25 = vld [vmem:[%s0 + $0x8] sm:$0xff]
    %v26 = vld [vmem:[%s1] sm:$0xff]
    %v27 = vld [vmem:[%s1 + $0x8] sm:$0xff]
    %v28 = vld [vmem:[%s1 + $0x10] sm:$0xff]
    %v29 = vld [vmem:[%s1 + $0x18] sm:$0xff]
    %vm30 = vcmask 261120
    %v32 = vsel %vm30, %v24, 0
    %v35 = vsel %vm30, %v25, 0
    %37 = vmatprep.subr.mxu0 0.0
    %38 = vmatpush1.msra.mxu0 %v26
    %39 = vmatprep.subr.mxu0 0.0
    %40 = vmatpush1.msra.mxu0 %v27
    %41 = vmatprep.subr.mxu0 0.0
    %42 = vmatpush1.msra.mxu0 %v28
    %43 = vmatprep.subr.mxu0 0.0
    %44 = vmatpush1.msra.mxu0 %v29
    %45 = vmatprep.subr.mxu0 0.0
    %46 = vmatpush1.msra.mxu0 0.0
    %47 = vmatprep.subr.mxu0 0.0
    %48 = vmatpush1.msra.mxu0 0.0
    %49 = vmatprep.subr.mxu0 0.0
    %50 = vmatpush1.msra.mxu0 0.0
    %51 = vmatprep.subr.mxu0 0.0
    %52 = vmatpush1.msra.mxu0 0.0
    %53 = vmatprep.subr.mxu0 0.0
    %54 = vmatpush1.msra.mxu0 0.0
    %55 = vmatprep.subr.mxu0 0.0
    %56 = vmatpush1.msra.mxu0 0.0
    %57 = vmatprep.subr.mxu0 0.0
    %58 = vmatpush1.msra.mxu0 0.0
    %59 = vmatprep.subr.mxu0 0.0
    %60 = vmatpush1.msra.mxu0 0.0
    %61 = vmatprep.subr.mxu0 0.0
    %62 = vmatpush1.msra.mxu0 0.0
    %63 = vmatprep.subr.mxu0 0.0
    %64 = vmatpush1.msra.mxu0 0.0
    %65 = vmatprep.subr.mxu0 0.0
    %66 = vmatpush1.msra.mxu0 0.0
    %67 = vmatprep.subr.mxu0 0.0
    %68 = vmatpush1.msra.mxu0 0.0
    %69 = vmatprep.subr.mxu0 0.0
    %70 = vmatpush1.msra.mxu0 0.0
    %71 = vmatprep.subr.mxu0 0.0
    %72 = vmatpush1.msra.mxu0 0.0
    %73 = vmatprep.subr.mxu0 0.0
    %74 = vmatpush1.msra.mxu0 0.0
    %75 = vmatprep.subr.mxu0 0.0
    %76 = vmatpush1.msra.mxu0 0.0
    %77 = vmatprep.subr.mxu0 0.0
    %78 = vmatpush1.msra.mxu0 0.0
    %79 = vmatprep.subr.mxu0 0.0
    %80 = vmatpush1.msra.mxu0 0.0
    %81 = vmatprep.subr.mxu0 0.0
    %82 = vmatpush1.msra.mxu0 0.0
    %83 = vmatprep.subr.mxu0 0.0
    %84 = vmatpush1.msra.mxu0 0.0
    %85 = vmatprep.subr.mxu0 0.0
    %86 = vmatpush1.msra.mxu0 0.0
    %87 = vmatprep.subr.mxu0 0.0
    %88 = vmatpush1.msra.mxu0 0.0
    %89 = vmatprep.subr.mxu0 0.0
    %90 = vmatpush1.msra.mxu0 0.0
    %91 = vmatprep.subr.mxu0 0.0
    %92 = vmatpush1.msra.mxu0 0.0
    %93 = vmatprep.subr.mxu0 0.0
    %94 = vmatpush1.msra.mxu0 0.0
    %95 = vmatprep.subr.mxu0 0.0
    %96 = vmatpush1.msra.mxu0 0.0
    %97 = vmatprep.subr.mxu0 0.0
    %98 = vmatpush1.msra.mxu0 0.0
    %99 = vmatprep.subr.mxu0 0.0
    %100 = vmatpush1.msra.mxu0 0.0
    %101 = vmatprep.mubr.f32.mxu0 0.0
    %102 = vmatmul.mubr.f32.gmra.mrb[0].mxu0 %v32
    %v103 = vpop.f32.mrb[0].mxu0
    %v104 = vadd.f32 0.0, %v103
    %v105 = vpop.f32.mrb[0].mxu0
    %106 = vmatprep.mubr.f32.mxu0 0.0
    %107 = vmatmul.mubr.f32.gmra.mrb[0].mxu0 %v35
    %v108 = vpop.f32.mrb[0].mxu0
    %v109 = vadd.f32 0.0, %v108
    %v110 = vpop.f32.mrb[0].mxu0
    %111 = vdwg.mxu0
    %v112 = vadd.f32 %v22, %v104
    %v113 = vadd.f32 %v23, %v109
    %114 = vst.msk [vmem:[#allocation2] sm:$0xff] %vm30, %v112
    %115 = vst.msk [vmem:[#allocation2 + $0x8] sm:$0xff] %vm30, %v113
    // Predicated region
    $region18: #{causal_self_attention.5} parent=1 // pred_check
      %p116 = pneg %p15
    $region19: #{causal_self_attention.5} parent=1 // pred_check_branch
      %118 = sbr.rel (%p116) target = $region21
    $region20: #{causal_self_attention.5} parent=1 // pred_region
      %v119 = vld [vmem:[#allocation2] sm:$0xff]
      %v120 = vld [vmem:[#allocation2 + $0x8] sm:$0xff]
      %v121 = vld [vmem:[%s2] sm:$0x1]
      %v123 = vlaneseq
      %v124 = vshrl.u32 %v123, 7
      %v125 = vsub.s32 0, %v124
      %v126 = vrot.slane %v121, %v125
      %v128 = vadd.f32 %v119, %v126
      %v129 = vadd.f32 %v120, %v126
      %130 = vst.msk [vmem:[#allocation3] sm:$0xff] %vm30, %v128
      %131 = vst.msk [vmem:[#allocation3 + $0x8] sm:$0xff] %vm30, %v129
    $region21: #{causal_self_attention.5} parent=1 // pred_fallthru
      _
    // Predicated region
    $region22: #{causal_self_attention.5} parent=1 // pred_check
      _
    $region23: #{causal_self_attention.5} parent=1 // pred_check_branch
      %133 = sbr.rel (0) target = $region25
    $region24: #{causal_self_attention.5} parent=1 // pred_region
      %s135 = ssub.s32 256, 256
      %136 = vsyncadd [#allocation4], %s135
      %s137 = sshll.u32 [#allocation3], 4
      %s138 = int_to_ptr.vmem [resolvable:$true] %s137
      %143 = dma.vmem_to_hbm [thread:$0]  %s138, 256, %s3, [#allocation4], 128, 128, 8
    $region25: #{causal_self_attention.5} parent=1 // pred_fallthru
      _
    // Predicated region
    $region26: #{causal_self_attention.5} parent=1 // pred_check
      _
    $region27: #{causal_self_attention.5} parent=1 // pred_check_branch
      %145 = sbr.rel (0) target = $region29
    $region28: #{causal_self_attention.5} parent=1 // pred_region
      %146 = dma.done [#allocation4], 256
    $region29: #{causal_self_attention.5} parent=1 // pred_fallthru
      _
    %147 = vsyncpa [#allocation4], 1

// kernel: causal_self_attention.4
$region0: #{causal_self_attention.4}
  #allocation0 [shape = 'u32[]', space=smem, size = 0x4, offset = 0x4, fixed_abs, tag = 'smem constant byte address 0x4 - core index']
  #allocation1 [shape = 'u32[144,128]{1,0:T(1,128)}', space=vmem, size = 0x12000, scoped, tag = 'internal scratch']
  #allocation2 [shape = 'f32[4,8,1]{2,1,0:T(8,128)}', space=vmem, size = 0x4000, scoped, tag = 'scratch operand']
  #allocation3 [shape = 'f32[4,8,1]{2,1,0:T(8,128)}', space=vmem, size = 0x4000, scoped, tag = 'scratch operand']
  #allocation4 [shape = 'f32[4,8,8]{2,1,0:T(8,128)}', space=vmem, size = 0x4000, scoped, tag = 'scratch operand']
  %s0 = inlined_call_operand.vmem [shape: f32[3,2,8,32], index: 0, kind: input, shape index: {}, may-alias: {0,1,2}]
  %s1 = inlined_call_operand.vmem [shape: f32[3,2,8,32], index: 1, kind: input, shape index: {}, may-alias: {0,1,2}]
  %s2 = inlined_call_operand.vmem [shape: f32[3,2,8,32], index: 2, kind: input, shape index: {}, may-alias: {0,1,2}]
  %s3 = inlined_call_operand.vmem [shape: f32[2,8,32], index: 3, kind: output, shape index: {}]
  %s4 = sld [smem:[#allocation0]]
  $region57: #{causal_self_attention.4} parent=0
    _
  %s6 = ssub.s32 1, %s4
  %s7 = scalar_select 0, %s6, %s4
  loop: start=0, step=1, limit=4
  $region2: #{causal_self_attention.4} parent=0 // loop_pre_header
    _
  $region3: #{causal_self_attention.4} parent=0 // loop_header
    %s9 = sphi 0, %s13
    %p10 = scmp.ge.s32.totalorder %s9, 4
    %s16 = sphi 0, %s35
    %s17 = sphi 0, %s31
    %s18 = sphi 0, %s27
    %s19 = sphi 0, %s16
    %s20 = sphi 0, %s17
    %s21 = sphi 0, %s18
    %s22 = sphi 0, %s19
    %s23 = sphi 0, %s20
    %s24 = sphi 0, %s21
    %s40 = sphi 0, %s42
    %s43 = sphi 0, %s40
    %s44 = sphi 0, %s43
    %s60 = sphi 0, %s44
    %s68 = sphi 0, %s70
    %s71 = sphi 0, %s68
    %s72 = sphi 0, %s71
    %s88 = sphi 0, %s72
    %s96 = sphi 0, %s98
    %s99 = sphi 0, %s96
    %s100 = sphi 0, %s99
    %s116 = sphi 0, %s100
    %s124 = sphi 0, %s126
    %s127 = sphi 0, %s124
    %s128 = sphi 0, %s127
    %s144 = sphi 0, %s128
  $region4: #{causal_self_attention.4} parent=0 // loop_header_branch
    %12 = sbr.rel (%p10) target = $region8
  $region5: #{causal_self_attention.4} parent=0 // loop_body
    %s14 = ssub.s32 %s9, 1
    %s15 = ssub.s32 %s9, 2
    %s25 = sadd.s32 1, %s18
    %p26 = scmp.ge.s32.totalorder %s25, 1
    %s27 = scalar_select %p26, 0, %s25
    %s28 = sadd.s32 1, %s17
    %s29 = scalar_select %p26, %s28, %s17
    %p30 = scmp.ge.s32.totalorder %s29, 1
    %s31 = scalar_select %p30, 0, %s29
    %s32 = sadd.s32 1, %s16
    %s33 = scalar_select %p30, %s32, %s16
    %p34 = scmp.ge.s32.totalorder %s33, 2
    %s35 = scalar_select %p34, 0, %s33
    %s36 = ssub.s32 %s16, %s35
    %s37 = ssub.s32 %s17, %s31
    %s38 = sor.u32 %s36, %s37
    %p39 = scmp.eq.s32.totalorder %s38, 0
    %s41 = sadd.s32 %s40, 1
    %s42 = scalar_select %p39, %s40, %s41
    %p45 = pneg %p39
    %p46 = scmp.eq.s32.totalorder %s9, 1
    %p47 = por %p45, %p46
    %p48 = scmp.ne.s32.totalorder %s40, %s43
    %p49 = scmp.eq.s32.totalorder %s9, 0
    %p50 = por %p48, %p49
    %p51 = scmp.ne.s32.totalorder %s40, %s43
    %p52 = scmp.eq.s32.totalorder %s14, 1
    %p53 = por %p51, %p52
    %p54 = scmp.ne.s32.totalorder %s43, %s44
    %p55 = scmp.eq.s32.totalorder %s14, 0
    %p56 = por %p54, %p55
    %p57 = scmp.ne.s32.totalorder %s43, %s44
    %p58 = scmp.eq.s32.totalorder %s15, 1
    %p59 = por %p57, %p58
    %p61 = scmp.ne.s32.totalorder %s44, %s60
    %p62 = scmp.eq.s32.totalorder %s15, 0
    %p63 = por %p61, %p62
    %s64 = ssub.s32 %s16, %s35
    %s65 = ssub.s32 %s18, %s27
    %s66 = sor.u32 %s64, %s65
    %p67 = scmp.eq.s32.totalorder %s66, 0
    %s69 = sadd.s32 %s68, 1
    %s70 = scalar_select %p67, %s68, %s69
    %p73 = pneg %p67
    %p74 = scmp.eq.s32.totalorder %s9, 1
    %p75 = por %p73, %p74
    %p76 = scmp.ne.s32.totalorder %s68, %s71
    %p77 = scmp.eq.s32.totalorder %s9, 0
    %p78 = por %p76, %p77
    %p79 = scmp.ne.s32.totalorder %s68, %s71
    %p80 = scmp.eq.s32.totalorder %s14, 1
    %p81 = por %p79, %p80
    %p82 = scmp.ne.s32.totalorder %s71, %s72
    %p83 = scmp.eq.s32.totalorder %s14, 0
    %p84 = por %p82, %p83
    %p85 = scmp.ne.s32.totalorder %s71, %s72
    %p86 = scmp.eq.s32.totalorder %s15, 1
    %p87 = por %p85, %p86
    %p89 = scmp.ne.s32.totalorder %s72, %s88
    %p90 = scmp.eq.s32.totalorder %s15, 0
    %p91 = por %p89, %p90
    %s92 = ssub.s32 %s16, %s35
    %s93 = ssub.s32 %s18, %s27
    %s94 = sor.u32 %s92, %s93
    %p95 = scmp.eq.s32.totalorder %s94, 0
    %s97 = sadd.s32 %s96, 1
    %s98 = scalar_select %p95, %s96, %s97
    %p101 = pneg %p95
    %p102 = scmp.eq.s32.totalorder %s9, 1
    %p103 = por %p101, %p102
    %p104 = scmp.ne.s32.totalorder %s96, %s99
    %p105 = scmp.eq.s32.totalorder %s9, 0
    %p106 = por %p104, %p105
    %p107 = scmp.ne.s32.totalorder %s96, %s99
    %p108 = scmp.eq.s32.totalorder %s14, 1
    %p109 = por %p107, %p108
    %p110 = scmp.ne.s32.totalorder %s99, %s100
    %p111 = scmp.eq.s32.totalorder %s14, 0
    %p112 = por %p110, %p111
    %p113 = scmp.ne.s32.totalorder %s99, %s100
    %p114 = scmp.eq.s32.totalorder %s15, 1
    %p115 = por %p113, %p114
    %p117 = scmp.ne.s32.totalorder %s100, %s116
    %p118 = scmp.eq.s32.totalorder %s15, 0
    %p119 = por %p117, %p118
    %s120 = ssub.s32 %s16, %s35
    %s121 = ssub.s32 %s17, %s31
    %s122 = sor.u32 %s120, %s121
    %p123 = scmp.eq.s32.totalorder %s122, 0
    %s125 = sadd.s32 %s124, 1
    %s126 = scalar_select %p123, %s124, %s125
    %p129 = pneg %p123
    %p130 = scmp.eq.s32.totalorder %s9, 1
    %p131 = por %p129, %p130
    %p132 = scmp.ne.s32.totalorder %s124, %s127
    %p133 = scmp.eq.s32.totalorder %s9, 0
    %p134 = por %p132, %p133
    %p135 = scmp.ne.s32.totalorder %s124, %s127
    %p136 = scmp.eq.s32.totalorder %s14, 1
    %p137 = por %p135, %p136
    %p138 = scmp.ne.s32.totalorder %s127, %s128
    %p139 = scmp.eq.s32.totalorder %s14, 0
    %p140 = por %p138, %p139
    %p141 = scmp.ne.s32.totalorder %s127, %s128
    %p142 = scmp.eq.s32.totalorder %s15, 1
    %p143 = por %p141, %p142
    %p145 = scmp.ne.s32.totalorder %s128, %s144
    %p146 = scmp.eq.s32.totalorder %s15, 0
    %p147 = por %p145, %p146
    %p148 = scmp.le.s32.totalorder 1, %s9
    %p149 = scmp.lt.s32.totalorder %s9, 3
    %p150 = pnand %p148, %p149
    %p151 = pneg %p150
    // Predicated region
    $region9: #{causal_self_attention.4} parent=5 // pred_check
      _
    $region10: #{causal_self_attention.4} parent=5 // pred_check_branch
      %153 = sbr.rel (%p150) target = $region12
    $region11: #{causal_self_attention.4} parent=5 // pred_region
      %s154 = ssub.s32 %s9, 1
    $region12: #{causal_self_attention.4} parent=5 // pred_fallthru
      _
    %p155 = scmp.lt.s32.totalorder %s9, 2
    // Predicated region
    $region13: #{causal_self_attention.4} parent=5 // pred_check
      %p156 = pneg %p155
    $region14: #{causal_self_attention.4} parent=5 // pred_check_branch
      %158 = sbr.rel (%p156) target = $region16
    $region15: #{causal_self_attention.4} parent=5 // pred_region
      // Predicated region
      $region17: #{causal_self_attention.4} parent=15 // pred_check
        %p159 = pneg %p50
      $region18: #{causal_self_attention.4} parent=15 // pred_check_branch
        %161 = sbr.rel (%p159) target = $region20
      $region19: #{causal_self_attention.4} parent=15 // pred_region
        %p162 = scmp.lt.s32.totalorder %s16, 1
        %s163 = scalar_select %p162, %s16, 1
        %p164 = scmp.lt.s32.totalorder %s17, 0
        %s165 = scalar_select %p164, %s17, 0
        %s166 = sadd.s32 %s165, %s163
        %s167 = smul.addr %s166, 8
        %s168 = scalar_lea.vmem %s0, %s167
      $region20: #{causal_self_attention.4} parent=15 // pred_fallthru
        _
      // Predicated region
      $region21: #{causal_self_attention.4} parent=15 // pred_check
        %p169 = pneg %p78
      $region22: #{causal_self_attention.4} parent=15 // pred_check_branch
        %171 = sbr.rel (%p169) target = $region24
      $region23: #{causal_self_attention.4} parent=15 // pred_region
        %p172 = scmp.lt.s32.totalorder %s16, 1
        %s173 = scalar_select %p172, %s16, 1
        %p174 = scmp.lt.s32.totalorder %s18, 0
        %s175 = scalar_select %p174, %s18, 0
        %s176 = sadd.s32 %s175, %s173
        %s177 = sadd.s32 %s176, 2
        %s178 = smul.addr %s177, 8
        %s179 = scalar_lea.vmem %s1, %s178
      $region24: #{causal_self_attention.4} parent=15 // pred_fallthru
        _
      // Predicated region
      $region25: #{causal_self_attention.4} parent=15 // pred_check
        %p180 = pneg %p106
      $region26: #{causal_self_attention.4} parent=15 // pred_check_branch
        %182 = sbr.rel (%p180) target = $region28
      $region27: #{causal_self_attention.4} parent=15 // pred_region
        %p183 = scmp.lt.s32.totalorder %s16, 1
        %s184 = scalar_select %p183, %s16, 1
        %p185 = scmp.lt.s32.totalorder %s18, 0
        %s186 = scalar_select %p185, %s18, 0
        %s187 = sadd.s32 %s186, %s184
        %s188 = sadd.s32 %s187, 4
        %s189 = smul.addr %s188, 8
        %s190 = scalar_lea.vmem %s2, %s189
      $region28: #{causal_self_attention.4} parent=15 // pred_fallthru
        _
    $region16: #{causal_self_attention.4} parent=5 // pred_fallthru
      _
    %p191 = scmp.le.s32.totalorder 1, %s9
    %p192 = scmp.lt.s32.totalorder %s9, 3
    %p193 = pnand %p191, %p192
    %p194 = pneg %p193
    // Predicated region
    $region29: #{causal_self_attention.4} parent=5 // pred_check
      _
    $region30: #{causal_self_attention.4} parent=5 // pred_check_branch
      %196 = sbr.rel (%p193) target = $region32
    $region31: #{causal_self_attention.4} parent=5 // pred_region
      %s197 = ssub.s32 %s9, 1
      %p198 = scmp.lt.s32.totalorder %s19, 1
      %s199 = scalar_select %p198, %s19, 1
      %p200 = scmp.lt.s32.totalorder %s20, 0
      %s201 = scalar_select %p200, %s20, 0
      %s202 = sadd.s32 %s201, %s199
      %s203 = smul.addr %s202, 8
      %s204 = scalar_lea.vmem %s0, %s203
      %p205 = pneg %p56
      %p206 = pneg %p53
      %p207 = scmp.lt.s32.totalorder %s19, 1
      %s208 = scalar_select %p207, %s19, 1
      %p209 = scmp.lt.s32.totalorder %s21, 0
      %s210 = scalar_select %p209, %s21, 0
      %s211 = sadd.s32 %s210, %s208
      %s212 = sadd.s32 %s211, 2
      %s213 = smul.addr %s212, 8
      %s214 = scalar_lea.vmem %s1, %s213
      %p215 = pneg %p84
      %p216 = pneg %p81
      %p217 = scmp.lt.s32.totalorder %s19, 1
      %s218 = scalar_select %p217, %s19, 1
      %p219 = scmp.lt.s32.totalorder %s21, 0
      %s220 = scalar_select %p219, %s21, 0
      %s221 = sadd.s32 %s220, %s218
      %s222 = sadd.s32 %s221, 4
      %s223 = smul.addr %s222, 8
      %s224 = scalar_lea.vmem %s2, %s223
      %p225 = pneg %p112
      %p226 = pneg %p109
      %p227 = pneg %p140
      %p228 = pneg %p137
      %p229 = scmp.lt.s32.totalorder %s19, 1
      %s230 = scalar_select %p229, %s19, 1
      %p231 = scmp.lt.s32.totalorder %s20, 0
      %s232 = scalar_select %p231, %s20, 0
      %s233 = sadd.s32 %s232, %s230
      %s234 = smul.addr %s233, 8
      %s235 = scalar_lea.vmem %s3, %s234
      %p236 = scmp.lt.s32.totalorder %s19, 1
      %s237 = scalar_select %p236, %s19, 1
      %p238 = scmp.lt.s32.totalorder %s20, 0
      %s239 = scalar_select %p238, %s20, 0
      %s240 = sadd.s32 %s239, %s237
      %s241 = smul.addr %s240, 8
      %s242 = scalar_lea.vmem %s0, %s241
      %p243 = scmp.lt.s32.totalorder %s19, 1
      %s244 = scalar_select %p243, %s19, 1
      %p245 = scmp.lt.s32.totalorder %s21, 0
      %s246 = scalar_select %p245, %s21, 0
      %s247 = sadd.s32 %s246, %s244
      %s248 = sadd.s32 %s247, 2
      %s249 = smul.addr %s248, 8
      %s250 = scalar_lea.vmem %s1, %s249
      %p251 = scmp.lt.s32.totalorder %s19, 1
      %s252 = scalar_select %p251, %s19, 1
      %p253 = scmp.lt.s32.totalorder %s21, 0
      %s254 = scalar_select %p253, %s21, 0
      %s255 = sadd.s32 %s254, %s252
      %s256 = sadd.s32 %s255, 4
      %s257 = smul.addr %s256, 8
      %s258 = scalar_lea.vmem %s2, %s257
      %p259 = scmp.lt.s32.totalorder %s19, 1
      %s260 = scalar_select %p259, %s19, 1
      %p261 = scmp.lt.s32.totalorder %s20, 0
      %s262 = scalar_select %p261, %s20, 0
      %s263 = sadd.s32 %s262, %s260
      %s264 = smul.addr %s263, 8
      %s265 = scalar_lea.vmem %s3, %s264
      %s266 = smul.u32 %s20, 8
      %s267 = smul.u32 %s21, 8
      %p268 = scmp.eq.s32.totalorder %s21, 0
      // Predicated region
      $region33: #{causal_self_attention.4} parent=31 // pred_check
        %p269 = pneg %p268
      $region34: #{causal_self_attention.4} parent=31 // pred_check_branch
        %271 = sbr.rel (%p269) target = $region36
      $region35: #{causal_self_attention.4} parent=31 // pred_region
        %vm272 = vcmask 7168
        %273 = vst.msk [vmem:[#allocation2] sm:$0xff] %vm272, -inf
        %274 = vst.msk [vmem:[#allocation2 + $0x8] sm:$0xff] %vm272, -inf
        %275 = vst.msk [vmem:[#allocation2 + $0x10] sm:$0xff] %vm272, -inf
        %276 = vst.msk [vmem:[#allocation2 + $0x18] sm:$0xff] %vm272, -inf
        %277 = vst.msk [vmem:[#allocation3] sm:$0xff] %vm272, 0.0
        %278 = vst.msk [vmem:[#allocation3 + $0x8] sm:$0xff] %vm272, 0.0
        %279 = vst.msk [vmem:[#allocation3 + $0x10] sm:$0xff] %vm272, 0.0
        %280 = vst.msk [vmem:[#allocation3 + $0x18] sm:$0xff] %vm272, 0.0
        %vm281 = vcmask 64512
        %282 = vst.msk [vmem:[#allocation4] sm:$0xff] %vm281, 0.0
        %283 = vst.msk [vmem:[#allocation4 + $0x8] sm:$0xff] %vm281, 0.0
        %284 = vst.msk [vmem:[#allocation4 + $0x10] sm:$0xff] %vm281, 0.0
        %285 = vst.msk [vmem:[#allocation4 + $0x18] sm:$0xff] %vm281, 0.0
      $region36: #{causal_self_attention.4} parent=31 // pred_fallthru
        _
      %s286 = sadd.s32 %s266, 7
      %p287 = scmp.le.s32.totalorder %s267, %s286
      // Predicated region
      $region37: #{causal_self_attention.4} parent=31 // pred_check
        %p288 = pneg %p287
      $region38: #{causal_self_attention.4} parent=31 // pred_check_branch
        %290 = sbr.rel (%p288) target = $region40
      $region39: #{causal_self_attention.4} parent=31 // pred_region
        %v291 = vld [vmem:[%s242] sm:$0xff]
        %v292 = vld [vmem:[%s250] sm:$0xff]
        %v293 = vld [vmem:[%s258] sm:$0xff]
        %v294 = vlaneseq
        %v295 = vshrl.u32 %v294, 7
        %v296 = vstv %s266
        %v297 = vadd.s32 %v296, %v295
        %v298 = vlaneseq
        %v299 = vand.u32 %v298, 127
        %v300 = vstv %s267
        %v301 = vadd.s32 %v300, %v299
        %vm302 = vcmp.le.s32.totalorder %v301, %v297
        %vm303 = vcmask 64512
        %v305 = vsel %vm303, %v291, 0
        %v308 = vsel %vm303, %v292, 0
        %310 = vmatprep.subr.mxu0 0.0
        %311 = vmatpush1.xpose.msra.mxu0 %v308
        %312 = vmatprep.subr.mxu0 0.0
        %313 = vmatpush1.xpose.msra.mxu0 0.0
        %314 = vmatprep.subr.mxu0 0.0
        %315 = vmatpush1.xpose.msra.mxu0 0.0
        %316 = vmatprep.subr.mxu0 0.0
        %317 = vmatpush1.xpose.msra.mxu0 0.0
        %318 = vmatprep.subr.mxu0 0.0
        %319 = vmatpush1.xpose.msra.mxu0 0.0
        %320 = vmatprep.subr.mxu0 0.0
        %321 = vmatpush1.xpose.msra.mxu0 0.0
        %322 = vmatprep.subr.mxu0 0.0
        %323 = vmatpush1.xpose.msra.mxu0 0.0
        %324 = vmatprep.subr.mxu0 0.0
        %325 = vmatpush1.xpose.msra.mxu0 0.0
        %326 = vmatprep.subr.mxu0 0.0
        %327 = vmatpush1.xpose.msra.mxu0 0.0
        %328 = vmatprep.subr.mxu0 0.0
        %329 = vmatpush1.xpose.msra.mxu0 0.0
        %330 = vmatprep.subr.mxu0 0.0
        %331 = vmatpush1.xpose.msra.mxu0 0.0
        %332 = vmatprep.subr.mxu0 0.0
        %333 = vmatpush1.xpose.msra.mxu0 0.0
        %334 = vmatprep.subr.mxu0 0.0
        %335 = vmatpush1.xpose.msra.mxu0 0.0
        %336 = vmatprep.subr.mxu0 0.0
        %337 = vmatpush1.xpose.msra.mxu0 0.0
        %338 = vmatprep.subr.mxu0 0.0
        %339 = vmatpush1.xpose.msra.mxu0 0.0
        %340 = vmatprep.subr.mxu0 0.0
        %341 = vmatpush1.xpose.msra.mxu0 0.0
        %342 = vmatprep.subr.mxu0 0.0
        %343 = vmatpush1.xpose.msra.mxu0 0.0
        %344 = vmatprep.subr.mxu0 0.0
        %345 = vmatpush1.xpose.msra.mxu0 0.0
        %346 = vmatprep.subr.mxu0 0.0
        %347 = vmatpush1.xpose.msra.mxu0 0.0
        %348 = vmatprep.subr.mxu0 0.0
        %349 = vmatpush1.xpose.msra.mxu0 0.0
        %350 = vmatprep.subr.mxu0 0.0
        %351 = vmatpush1.xpose.msra.mxu0 0.0
        %352 = vmatprep.subr.mxu0 0.0
        %353 = vmatpush1.xpose.msra.mxu0 0.0
        %354 = vmatprep.subr.mxu0 0.0
        %355 = vmatpush1.xpose.msra.mxu0 0.0
        %356 = vmatprep.subr.mxu0 0.0
        %357 = vmatpush1.xpose.msra.mxu0 0.0
        %358 = vmatprep.subr.mxu0 0.0
        %359 = vmatpush1.xpose.msra.mxu0 0.0
        %360 = vmatprep.subr.mxu0 0.0
        %361 = vmatpush1.xpose.msra.mxu0 0.0
        %362 = vmatprep.subr.mxu0 0.0
        %363 = vmatpush1.xpose.msra.mxu0 0.0
        %364 = vmatprep.subr.mxu0 0.0
        %365 = vmatpush1.xpose.msra.mxu0 0.0
        %366 = vmatprep.subr.mxu0 0.0
        %367 = vmatpush1.xpose.msra.mxu0 0.0
        %368 = vmatprep.subr.mxu0 0.0
        %369 = vmatpush1.xpose.msra.mxu0 0.0
        %370 = vmatprep.subr.mxu0 0.0
        %371 = vmatpush1.xpose.msra.mxu0 0.0
        %372 = vmatprep.subr.mxu0 0.0
        %373 = vmatpush1.xpose.msra.mxu0 0.0
        %374 = vmatprep.mubr.f32.mxu0 0.0
        %375 = vmatmul.mubr.f32.gmra.mrb[0].mxu0 %v305
        %v376 = vpop.f32.mrb[0].mxu0
        %v377 = vadd.f32 0.0, %v376
        %v378 = vpop.f32.mrb[0].mxu0
        %379 = vdwg.mxu0
        %v380 = vmul.f32 %v377, 0.35355338
        %v381 = vsel %vm302, %v380, -inf
        %v382 = vld [vmem:[#allocation2] sm:$0xff]
        %v383 = vsel %vm303, %v381, -inf
        %384 = vmax.xlane.f32.xlu0 %v383
        %v385 = vpop.xlane.xlu0 %384
        %v386 = vmax.f32 %v382, %v385
        %v387 = vsub.f32 %v382, %v386
        %v388 = vmul.f32 %v387, 1.442695
        %v389 = vpow.pop %v388
        %391 = vset.pattern.permute.xlu0 0
        %392 = vperm.xlu0 %391, %v386
        %v393 = vpop.permute.xlu0 %392
        %v395 = vsub.f32 %v381, %v393
        %v396 = vmul.f32 %v395, 1.442695
        %v397 = vpow.pop %v396
        %v398 = vld [vmem:[#allocation3] sm:$0xff]
        %v399 = vmul.f32 %v389, %v398
        %v400 = vsel %vm303, %v397, 0.0
        %401 = vadd.xlane.f32.xlu0 %v400
        %v402 = vpop.xlane.xlu0 %401
        %v403 = vadd.f32 %v399, %v402
        %vm404 = vcmask 7168
        %405 = vst.msk [vmem:[#allocation3] sm:$0xff] %vm404, %v403
        %v406 = vld [vmem:[#allocation4] sm:$0xff]
        %408 = vset.pattern.permute.xlu0 0
        %409 = vperm.xlu0 %408, %v389
        %v410 = vpop.permute.xlu0 %409
        %v412 = vmul.f32 %v410, %v406
        %v414 = vsel %vm303, %v397, 0
        %416 = vmatprep.subr.mxu0 0.0
        %417 = vmatpush1.msra.mxu0 %v293
        %418 = vmatprep.subr.mxu0 0.0
        %419 = vmatpush1.msra.mxu0 0.0
        %420 = vmatprep.subr.mxu0 0.0
        %421 = vmatpush1.msra.mxu0 0.0
        %422 = vmatprep.subr.mxu0 0.0
        %423 = vmatpush1.msra.mxu0 0.0
        %424 = vmatprep.subr.mxu0 0.0
        %425 = vmatpush1.msra.mxu0 0.0
        %426 = vmatprep.subr.mxu0 0.0
        %427 = vmatpush1.msra.mxu0 0.0
        %428 = vmatprep.subr.mxu0 0.0
        %429 = vmatpush1.msra.mxu0 0.0
        %430 = vmatprep.subr.mxu0 0.0
        %431 = vmatpush1.msra.mxu0 0.0
        %432 = vmatprep.subr.mxu0 0.0
        %433 = vmatpush1.msra.mxu0 0.0
        %434 = vmatprep.subr.mxu0 0.0
        %435 = vmatpush1.msra.mxu0 0.0
        %436 = vmatprep.subr.mxu0 0.0
        %437 = vmatpush1.msra.mxu0 0.0
        %438 = vmatprep.subr.mxu0 0.0
        %439 = vmatpush1.msra.mxu0 0.0
        %440 = vmatprep.subr.mxu0 0.0
        %441 = vmatpush1.msra.mxu0 0.0
        %442 = vmatprep.subr.mxu0 0.0
        %443 = vmatpush1.msra.mxu0 0.0
        %444 = vmatprep.subr.mxu0 0.0
        %445 = vmatpush1.msra.mxu0 0.0
        %446 = vmatprep.subr.mxu0 0.0
        %447 = vmatpush1.msra.mxu0 0.0
        %448 = vmatprep.subr.mxu0 0.0
        %449 = vmatpush1.msra.mxu0 0.0
        %450 = vmatprep.subr.mxu0 0.0
        %451 = vmatpush1.msra.mxu0 0.0
        %452 = vmatprep.subr.mxu0 0.0
        %453 = vmatpush1.msra.mxu0 0.0
        %454 = vmatprep.subr.mxu0 0.0
        %455 = vmatpush1.msra.mxu0 0.0
        %456 = vmatprep.subr.mxu0 0.0
        %457 = vmatpush1.msra.mxu0 0.0
        %458 = vmatprep.subr.mxu0 0.0
        %459 = vmatpush1.msra.mxu0 0.0
        %460 = vmatprep.subr.mxu0 0.0
        %461 = vmatpush1.msra.mxu0 0.0
        %462 = vmatprep.subr.mxu0 0.0
        %463 = vmatpush1.msra.mxu0 0.0
        %464 = vmatprep.subr.mxu0 0.0
        %465 = vmatpush1.msra.mxu0 0.0
        %466 = vmatprep.subr.mxu0 0.0
        %467 = vmatpush1.msra.mxu0 0.0
        %468 = vmatprep.subr.mxu0 0.0
        %469 = vmatpush1.msra.mxu0 0.0
        %470 = vmatprep.subr.mxu0 0.0
        %471 = vmatpush1.msra.mxu0 0.0
        %472 = vmatprep.subr.mxu0 0.0
        %473 = vmatpush1.msra.mxu0 0.0
        %474 = vmatprep.subr.mxu0 0.0
        %475 = vmatpush1.msra.mxu0 0.0
        %476 = vmatprep.subr.mxu0 0.0
        %477 = vmatpush1.msra.mxu0 0.0
        %478 = vmatprep.subr.mxu0 0.0
        %479 = vmatpush1.msra.mxu0 0.0
        %480 = vmatprep.mubr.f32.mxu0 0.0
        %481 = vmatmul.mubr.f32.gmra.mrb[0].mxu0 %v414
        %v482 = vpop.f32.mrb[0].mxu0
        %v483 = vadd.f32 0.0, %v482
        %v484 = vpop.f32.mrb[0].mxu0
        %485 = vdwg.mxu0
        %v486 = vadd.f32 %v412, %v483
        %487 = vst.msk [vmem:[#allocation4] sm:$0xff] %vm303, %v486
        %488 = vst.msk [vmem:[#allocation2] sm:$0xff] %vm404, %v386
        %489 = vrot.lane.b32.xlu0 %v291, 120
        %v490 = vpop.permute.xlu0 %489
        %491 = vrot.lane.b32.xlu0 %v292, 120
        %v492 = vpop.permute.xlu0 %491
        %v493 = vsel %vm303, %v490, 0
        %v495 = vsel %vm303, %v492, 0
        %497 = vmatprep.subr.mxu0 0.0
        %498 = vmatpush1.xpose.msra.mxu0 %v495
        %499 = vmatprep.subr.mxu0 0.0
        %500 = vmatpush1.xpose.msra.mxu0 0.0
        %501 = vmatprep.subr.mxu0 0.0
        %502 = vmatpush1.xpose.msra.mxu0 0.0
        %503 = vmatprep.subr.mxu0 0.0
        %504 = vmatpush1.xpose.msra.mxu0 0.0
        %505 = vmatprep.subr.mxu0 0.0
        %506 = vmatpush1.xpose.msra.mxu0 0.0
        %507 = vmatprep.subr.mxu0 0.0
        %508 = vmatpush1.xpose.msra.mxu0 0.0
        %509 = vmatprep.subr.mxu0 0.0
        %510 = vmatpush1.xpose.msra.mxu0 0.0
        %511 = vmatprep.subr.mxu0 0.0
        %512 = vmatpush1.xpose.msra.mxu0 0.0
        %513 = vmatprep.subr.mxu0 0.0
        %514 = vmatpush1.xpose.msra.mxu0 0.0
        %515 = vmatprep.subr.mxu0 0.0
        %516 = vmatpush1.xpose.msra.mxu0 0.0
        %517 = vmatprep.subr.mxu0 0.0
        %518 = vmatpush1.xpose.msra.mxu0 0.0
        %519 = vmatprep.subr.mxu0 0.0
        %520 = vmatpush1.xpose.msra.mxu0 0.0
        %521 = vmatprep.subr.mxu0 0.0
        %522 = vmatpush1.xpose.msra.mxu0 0.0
        %523 = vmatprep.subr.mxu0 0.0
        %524 = vmatpush1.xpose.msra.mxu0 0.0
        %525 = vmatprep.subr.mxu0 0.0
        %526 = vmatpush1.xpose.msra.mxu0 0.0
        %527 = vmatprep.subr.mxu0 0.0
        %528 = vmatpush1.xpose.msra.mxu0 0.0
        %529 = vmatprep.subr.mxu0 0.0
        %530 = vmatpush1.xpose.msra.mxu0 0.0
        %531 = vmatprep.subr.mxu0 0.0
        %532 = vmatpush1.xpose.msra.mxu0 0.0
        %533 = vmatprep.subr.mxu0 0.0
        %534 = vmatpush1.xpose.msra.mxu0 0.0
        %535 = vmatprep.subr.mxu0 0.0
        %536 = vmatpush1.xpose.msra.mxu0 0.0
        %537 = vmatprep.subr.mxu0 0.0
        %538 = vmatpush1.xpose.msra.mxu0 0.0
        %539 = vmatprep.subr.mxu0 0.0
        %540 = vmatpush1.xpose.msra.mxu0 0.0
        %541 = vmatprep.subr.mxu0 0.0
        %542 = vmatpush1.xpose.msra.mxu0 0.0
        %543 = vmatprep.subr.mxu0 0.0
        %544 = vmatpush1.xpose.msra.mxu0 0.0
        %545 = vmatprep.subr.mxu0 0.0
        %546 = vmatpush1.xpose.msra.mxu0 0.0
        %547 = vmatprep.subr.mxu0 0.0
        %548 = vmatpush1.xpose.msra.mxu0 0.0
        %549 = vmatprep.subr.mxu0 0.0
        %550 = vmatpush1.xpose.msra.mxu0 0.0
        %551 = vmatprep.subr.mxu0 0.0
        %552 = vmatpush1.xpose.msra.mxu0 0.0
        %553 = vmatprep.subr.mxu0 0.0
        %554 = vmatpush1.xpose.msra.mxu0 0.0
        %555 = vmatprep.subr.mxu0 0.0
        %556 = vmatpush1.xpose.msra.mxu0 0.0
        %557 = vmatprep.subr.mxu0 0.0
        %558 = vmatpush1.xpose.msra.mxu0 0.0
        %559 = vmatprep.subr.mxu0 0.0
        %560 = vmatpush1.xpose.msra.mxu0 0.0
        %561 = vmatprep.mubr.f32.mxu0 0.0
        %562 = vmatmul.mubr.f32.gmra.mrb[0].mxu0 %v493
        %v563 = vpop.f32.mrb[0].mxu0
        %v564 = vadd.f32 0.0, %v563
        %v565 = vpop.f32.mrb[0].mxu0
        %566 = vdwg.mxu0
        %v567 = vmul.f32 %v564, 0.35355338
        %v568 = vsel %vm302, %v567, -inf
        %s569 = scalar_lea.vmem [#allocation2], 8
        %v570 = vld [vmem:[%s569] sm:$0xff]
        %v571 = vsel %vm303, %v568, -inf
        %572 = vmax.xlane.f32.xlu0 %v571
        %v573 = vpop.xlane.xlu0 %572
        %v574 = vmax.f32 %v570, %v573
        %v575 = vsub.f32 %v570, %v574
        %v576 = vmul.f32 %v575, 1.442695
        %v577 = vpow.pop %v576
        %579 = vset.pattern.permute.xlu0 0
        %580 = vperm.xlu0 %579, %v574
        %v581 = vpop.permute.xlu0 %580
        %v583 = vsub.f32 %v568, %v581
        %v584 = vmul.f32 %v583, 1.442695
        %v585 = vpow.pop %v584
        %s586 = scalar_lea.vmem [#allocation3], 8
        %v587 = vld [vmem:[%s586] sm:$0xff]
        %v588 = vmul.f32 %v577, %v587
        %v589 = vsel %vm303, %v585, 0.0
        %590 = vadd.xlane.f32.xlu0 %v589
        %v591 = vpop.xlane.xlu0 %590
        %v592 = vadd.f32 %v588, %v591
        %593 = vst.msk [vmem:[%s586] sm:$0xff] %vm404, %v592
        %s594 = scalar_lea.vmem [#allocation4], 8
        %v595 = vld [vmem:[%s594] sm:$0xff]
        %597 = vset.pattern.permute.xlu0 0
        %598 = vperm.xlu0 %597, %v577
        %v599 = vpop.permute.xlu0 %598
        %v601 = vmul.f32 %v599, %v595
        %603 = vrot.lane.b32.xlu0 %v293, 120
        %v604 = vpop.permute.xlu0 %603
        %v607 = vsel %vm303, %v585, 0
        %609 = vmatprep.subr.mxu0 0.0
        %610 = vmatpush1.msra.mxu0 %v604
        %611 = vmatprep.subr.mxu0 0.0
        %612 = vmatpush1.msra.mxu0 0.0
        %613 = vmatprep.subr.mxu0 0.0
        %614 = vmatpush1.msra.mxu0 0.0
        %615 = vmatprep.subr.mxu0 0.0
        %616 = vmatpush1.msra.mxu0 0.0
        %617 = vmatprep.subr.mxu0 0.0
        %618 = vmatpush1.msra.mxu0 0.0
        %619 = vmatprep.subr.mxu0 0.0
        %620 = vmatpush1.msra.mxu0 0.0
        %621 = vmatprep.subr.mxu0 0.0
        %622 = vmatpush1.msra.mxu0 0.0
        %623 = vmatprep.subr.mxu0 0.0
        %624 = vmatpush1.msra.mxu0 0.0
        %625 = vmatprep.subr.mxu0 0.0
        %626 = vmatpush1.msra.mxu0 0.0
        %627 = vmatprep.subr.mxu0 0.0
        %628 = vmatpush1.msra.mxu0 0.0
        %629 = vmatprep.subr.mxu0 0.0
        %630 = vmatpush1.msra.mxu0 0.0
        %631 = vmatprep.subr.mxu0 0.0
        %632 = vmatpush1.msra.mxu0 0.0
        %633 = vmatprep.subr.mxu0 0.0
        %634 = vmatpush1.msra.mxu0 0.0
        %635 = vmatprep.subr.mxu0 0.0
        %636 = vmatpush1.msra.mxu0 0.0
        %637 = vmatprep.subr.mxu0 0.0
        %638 = vmatpush1.msra.mxu0 0.0
        %639 = vmatprep.subr.mxu0 0.0
        %640 = vmatpush1.msra.mxu0 0.0
        %641 = vmatprep.subr.mxu0 0.0
        %642 = vmatpush1.msra.mxu0 0.0
        %643 = vmatprep.subr.mxu0 0.0
        %644 = vmatpush1.msra.mxu0 0.0
        %645 = vmatprep.subr.mxu0 0.0
        %646 = vmatpush1.msra.mxu0 0.0
        %647 = vmatprep.subr.mxu0 0.0
        %648 = vmatpush1.msra.mxu0 0.0
        %649 = vmatprep.subr.mxu0 0.0
        %650 = vmatpush1.msra.mxu0 0.0
        %651 = vmatprep.subr.mxu0 0.0
        %652 = vmatpush1.msra.mxu0 0.0
        %653 = vmatprep.subr.mxu0 0.0
        %654 = vmatpush1.msra.mxu0 0.0
        %655 = vmatprep.subr.mxu0 0.0
        %656 = vmatpush1.msra.mxu0 0.0
        %657 = vmatprep.subr.mxu0 0.0
        %658 = vmatpush1.msra.mxu0 0.0
        %659 = vmatprep.subr.mxu0 0.0
        %660 = vmatpush1.msra.mxu0 0.0
        %661 = vmatprep.subr.mxu0 0.0
        %662 = vmatpush1.msra.mxu0 0.0
        %663 = vmatprep.subr.mxu0 0.0
        %664 = vmatpush1.msra.mxu0 0.0
        %665 = vmatprep.subr.mxu0 0.0
        %666 = vmatpush1.msra.mxu0 0.0
        %667 = vmatprep.subr.mxu0 0.0
        %668 = vmatpush1.msra.mxu0 0.0
        %669 = vmatprep.subr.mxu0 0.0
        %670 = vmatpush1.msra.mxu0 0.0
        %671 = vmatprep.subr.mxu0 0.0
        %672 = vmatpush1.msra.mxu0 0.0
        %673 = vmatprep.mubr.f32.mxu0 0.0
        %674 = vmatmul.mubr.f32.gmra.mrb[0].mxu0 %v607
        %v675 = vpop.f32.mrb[0].mxu0
        %v676 = vadd.f32 0.0, %v675
        %v677 = vpop.f32.mrb[0].mxu0
        %678 = vdwg.mxu0
        %v679 = vadd.f32 %v601, %v676
        %680 = vst.msk [vmem:[%s594] sm:$0xff] %vm303, %v679
        %681 = vst.msk [vmem:[%s569] sm:$0xff] %vm404, %v574
        %682 = vrot.lane.b32.xlu0 %v291, 112
        %v683 = vpop.permute.xlu0 %682
        %684 = vrot.lane.b32.xlu0 %v292, 112
        %v685 = vpop.permute.xlu0 %684
        %v686 = vsel %vm303, %v683, 0
        %v688 = vsel %vm303, %v685, 0
        %690 = vmatprep.subr.mxu0 0.0
        %691 = vmatpush1.xpose.msra.mxu0 %v688
        %692 = vmatprep.subr.mxu0 0.0
        %693 = vmatpush1.xpose.msra.mxu0 0.0
        %694 = vmatprep.subr.mxu0 0.0
        %695 = vmatpush1.xpose.msra.mxu0 0.0
        %696 = vmatprep.subr.mxu0 0.0
        %697 = vmatpush1.xpose.msra.mxu0 0.0
        %698 = vmatprep.subr.mxu0 0.0
        %699 = vmatpush1.xpose.msra.mxu0 0.0
        %700 = vmatprep.subr.mxu0 0.0
        %701 = vmatpush1.xpose.msra.mxu0 0.0
        %702 = vmatprep.subr.mxu0 0.0
        %703 = vmatpush1.xpose.msra.mxu0 0.0
        %704 = vmatprep.subr.mxu0 0.0
        %705 = vmatpush1.xpose.msra.mxu0 0.0
        %706 = vmatprep.subr.mxu0 0.0
        %707 = vmatpush1.xpose.msra.mxu0 0.0
        %708 = vmatprep.subr.mxu0 0.0
        %709 = vmatpush1.xpose.msra.mxu0 0.0
        %710 = vmatprep.subr.mxu0 0.0
        %711 = vmatpush1.xpose.msra.mxu0 0.0
        %712 = vmatprep.subr.mxu0 0.0
        %713 = vmatpush1.xpose.msra.mxu0 0.0
        %714 = vmatprep.subr.mxu0 0.0
        %715 = vmatpush1.xpose.msra.mxu0 0.0
        %716 = vmatprep.subr.mxu0 0.0
        %717 = vmatpush1.xpose.msra.mxu0 0.0
        %718 = vmatprep.subr.mxu0 0.0
        %719 = vmatpush1.xpose.msra.mxu0 0.0
        %720 = vmatprep.subr.mxu0 0.0
        %721 = vmatpush1.xpose.msra.mxu0 0.0
        %722 = vmatprep.subr.mxu0 0.0
        %723 = vmatpush1.xpose.msra.mxu0 0.0
        %724 = vmatprep.subr.mxu0 0.0
        %725 = vmatpush1.xpose.msra.mxu0 0.0
        %726 = vmatprep.subr.mxu0 0.0
        %727 = vmatpush1.xpose.msra.mxu0 0.0
        %728 = vmatprep.subr.mxu0 0.0
        %729 = vmatpush1.xpose.msra.mxu0 0.0
        %730 = vmatprep.subr.mxu0 0.0
        %731 = vmatpush1.xpose.msra.mxu0 0.0
        %732 = vmatprep.subr.mxu0 0.0
        %733 = vmatpush1.xpose.msra.mxu0 0.0
        %734 = vmatprep.subr.mxu0 0.0
        %735 = vmatpush1.xpose.msra.mxu0 0.0
        %736 = vmatprep.subr.mxu0 0.0
        %737 = vmatpush1.xpose.msra.mxu0 0.0
        %738 = vmatprep.subr.mxu0 0.0
        %739 = vmatpush1.xpose.msra.mxu0 0.0
        %740 = vmatprep.subr.mxu0 0.0
        %741 = vmatpush1.xpose.msra.mxu0 0.0
        %742 = vmatprep.subr.mxu0 0.0
        %743 = vmatpush1.xpose.msra.mxu0 0.0
        %744 = vmatprep.subr.mxu0 0.0
        %745 = vmatpush1.xpose.msra.mxu0 0.0
        %746 = vmatprep.subr.mxu0 0.0
        %747 = vmatpush1.xpose.msra.mxu0 0.0
        %748 = vmatprep.subr.mxu0 0.0
        %749 = vmatpush1.xpose.msra.mxu0 0.0
        %750 = vmatprep.subr.mxu0 0.0
        %751 = vmatpush1.xpose.msra.mxu0 0.0
        %752 = vmatprep.subr.mxu0 0.0
        %753 = vmatpush1.xpose.msra.mxu0 0.0
        %754 = vmatprep.mubr.f32.mxu0 0.0
        %755 = vmatmul.mubr.f32.gmra.mrb[0].mxu0 %v686
        %v756 = vpop.f32.mrb[0].mxu0
        %v757 = vadd.f32 0.0, %v756
        %v758 = vpop.f32.mrb[0].mxu0
        %759 = vdwg.mxu0
        %v760 = vmul.f32 %v757, 0.35355338
        %v761 = vsel %vm302, %v760, -inf
        %s762 = scalar_lea.vmem [#allocation2], 16
        %v763 = vld [vmem:[%s762] sm:$0xff]
        %v764 = vsel %vm303, %v761, -inf
        %765 = vmax.xlane.f32.xlu0 %v764
        %v766 = vpop.xlane.xlu0 %765
        %v767 = vmax.f32 %v763, %v766
        %v768 = vsub.f32 %v763, %v767
        %v769 = vmul.f32 %v768, 1.442695
        %v770 = vpow.pop %v769
        %772 = vset.pattern.permute.xlu0 0
        %773 = vperm.xlu0 %772, %v767
        %v774 = vpop.permute.xlu0 %773
        %v776 = vsub.f32 %v761, %v774
        %v777 = vmul.f32 %v776, 1.442695
        %v778 = vpow.pop %v777
        %s779 = scalar_lea.vmem [#allocation3], 16
        %v780 = vld [vmem:[%s779] sm:$0xff]
        %v781 = vmul.f32 %v770, %v780
        %v782 = vsel %vm303, %v778, 0.0
        %783 = vadd.xlane.f32.xlu0 %v782
        %v784 = vpop.xlane.xlu0 %783
        %v785 = vadd.f32 %v781, %v784
        %786 = vst.msk [vmem:[%s779] sm:$0xff] %vm404, %v785
        %s787 = scalar_lea.vmem [#allocation4], 16
        %v788 = vld [vmem:[%s787] sm:$0xff]
        %790 = vset.pattern.permute.xlu0 0
        %791 = vperm.xlu0 %790, %v770
        %v792 = vpop.permute.xlu0 %791
        %v794 = vmul.f32 %v792, %v788
        %795 = vrot.lane.b32.xlu0 %v293, 112
        %v796 = vpop.permute.xlu0 %795
        %v799 = vsel %vm303, %v778, 0
        %801 = vmatprep.subr.mxu0 0.0
        %802 = vmatpush1.msra.mxu0 %v796
        %803 = vmatprep.subr.mxu0 0.0
        %804 = vmatpush1.msra.mxu0 0.0
        %805 = vmatprep.subr.mxu0 0.0
        %806 = vmatpush1.msra.mxu0 0.0
        %807 = vmatprep.subr.mxu0 0.0
        %808 = vmatpush1.msra.mxu0 0.0
        %809 = vmatprep.subr.mxu0 0.0
        %810 = vmatpush1.msra.mxu0 0.0
        %811 = vmatprep.subr.mxu0 0.0
        %812 = vmatpush1.msra.mxu0 0.0
        %813 = vmatprep.subr.mxu0 0.0
        %814 = vmatpush1.msra.mxu0 0.0
        %815 = vmatprep.subr.mxu0 0.0
        %816 = vmatpush1.msra.mxu0 0.0
        %817 = vmatprep.subr.mxu0 0.0
        %818 = vmatpush1.msra.mxu0 0.0
        %819 = vmatprep.subr.mxu0 0.0
        %820 = vmatpush1.msra.mxu0 0.0
        %821 = vmatprep.subr.mxu0 0.0
        %822 = vmatpush1.msra.mxu0 0.0
        %823 = vmatprep.subr.mxu0 0.0
        %824 = vmatpush1.msra.mxu0 0.0
        %825 = vmatprep.subr.mxu0 0.0
        %826 = vmatpush1.msra.mxu0 0.0
        %827 = vmatprep.subr.mxu0 0.0
        %828 = vmatpush1.msra.mxu0 0.0
        %829 = vmatprep.subr.mxu0 0.0
        %830 = vmatpush1.msra.mxu0 0.0
        %831 = vmatprep.subr.mxu0 0.0
        %832 = vmatpush1.msra.mxu0 0.0
        %833 = vmatprep.subr.mxu0 0.0
        %834 = vmatpush1.msra.mxu0 0.0
        %835 = vmatprep.subr.mxu0 0.0
        %836 = vmatpush1.msra.mxu0 0.0
        %837 = vmatprep.subr.mxu0 0.0
        %838 = vmatpush1.msra.mxu0 0.0
        %839 = vmatprep.subr.mxu0 0.0
        %840 = vmatpush1.msra.mxu0 0.0
        %841 = vmatprep.subr.mxu0 0.0
        %842 = vmatpush1.msra.mxu0 0.0
        %843 = vmatprep.subr.mxu0 0.0
        %844 = vmatpush1.msra.mxu0 0.0
        %845 = vmatprep.subr.mxu0 0.0
        %846 = vmatpush1.msra.mxu0 0.0
        %847 = vmatprep.subr.mxu0 0.0
        %848 = vmatpush1.msra.mxu0 0.0
        %849 = vmatprep.subr.mxu0 0.0
        %850 = vmatpush1.msra.mxu0 0.0
        %851 = vmatprep.subr.mxu0 0.0
        %852 = vmatpush1.msra.mxu0 0.0
        %853 = vmatprep.subr.mxu0 0.0
        %854 = vmatpush1.msra.mxu0 0.0
        %855 = vmatprep.subr.mxu0 0.0
        %856 = vmatpush1.msra.mxu0 0.0
        %857 = vmatprep.subr.mxu0 0.0
        %858 = vmatpush1.msra.mxu0 0.0
        %859 = vmatprep.subr.mxu0 0.0
        %860 = vmatpush1.msra.mxu0 0.0
        %861 = vmatprep.subr.mxu0 0.0
        %862 = vmatpush1.msra.mxu0 0.0
        %863 = vmatprep.subr.mxu0 0.0
        %864 = vmatpush1.msra.mxu0 0.0
        %865 = vmatprep.mubr.f32.mxu0 0.0
        %866 = vmatmul.mubr.f32.gmra.mrb[0].mxu0 %v799
        %v867 = vpop.f32.mrb[0].mxu0
        %v868 = vadd.f32 0.0, %v867
        %v869 = vpop.f32.mrb[0].mxu0
        %870 = vdwg.mxu0
        %v871 = vadd.f32 %v794, %v868
        %872 = vst.msk [vmem:[%s787] sm:$0xff] %vm303, %v871
        %873 = vst.msk [vmem:[%s762] sm:$0xff] %vm404, %v767
        %874 = vrot.lane.b32.xlu0 %v291, 104
        %v875 = vpop.permute.xlu0 %874
        %876 = vrot.lane.b32.xlu0 %v292, 104
        %v877 = vpop.permute.xlu0 %876
        %v878 = vsel %vm303, %v875, 0
        %v880 = vsel %vm303, %v877, 0
        %882 = vmatprep.subr.mxu0 0.0
        %883 = vmatpush1.xpose.msra.mxu0 %v880
        %884 = vmatprep.subr.mxu0 0.0
        %885 = vmatpush1.xpose.msra.mxu0 0.0
        %886 = vmatprep.subr.mxu0 0.0
        %887 = vmatpush1.xpose.msra.mxu0 0.0
        %888 = vmatprep.subr.mxu0 0.0
        %889 = vmatpush1.xpose.msra.mxu0 0.0
        %890 = vmatprep.subr.mxu0 0.0
        %891 = vmatpush1.xpose.msra.mxu0 0.0
        %892 = vmatprep.subr.mxu0 0.0
        %893 = vmatpush1.xpose.msra.mxu0 0.0
        %894 = vmatprep.subr.mxu0 0.0
        %895 = vmatpush1.xpose.msra.mxu0 0.0
        %896 = vmatprep.subr.mxu0 0.0
        %897 = vmatpush1.xpose.msra.mxu0 0.0
        %898 = vmatprep.subr.mxu0 0.0
        %899 = vmatpush1.xpose.msra.mxu0 0.0
        %900 = vmatprep.subr.mxu0 0.0
        %901 = vmatpush1.xpose.msra.mxu0 0.0
        %902 = vmatprep.subr.mxu0 0.0
        %903 = vmatpush1.xpose.msra.mxu0 0.0
        %904 = vmatprep.subr.mxu0 0.0
        %905 = vmatpush1.xpose.msra.mxu0 0.0
        %906 = vmatprep.subr.mxu0 0.0
        %907 = vmatpush1.xpose.msra.mxu0 0.0
        %908 = vmatprep.subr.mxu0 0.0
        %909 = vmatpush1.xpose.msra.mxu0 0.0
        %910 = vmatprep.subr.mxu0 0.0
        %911 = vmatpush1.xpose.msra.mxu0 0.0
        %912 = vmatprep.subr.mxu0 0.0
        %913 = vmatpush1.xpose.msra.mxu0 0.0
        %914 = vmatprep.subr.mxu0 0.0
        %915 = vmatpush1.xpose.msra.mxu0 0.0
        %916 = vmatprep.subr.mxu0 0.0
        %917 = vmatpush1.xpose.msra.mxu0 0.0
        %918 = vmatprep.subr.mxu0 0.0
        %919 = vmatpush1.xpose.msra.mxu0 0.0
        %920 = vmatprep.subr.mxu0 0.0
        %921 = vmatpush1.xpose.msra.mxu0 0.0
        %922 = vmatprep.subr.mxu0 0.0
        %923 = vmatpush1.xpose.msra.mxu0 0.0
        %924 = vmatprep.subr.mxu0 0.0
        %925 = vmatpush1.xpose.msra.mxu0 0.0
        %926 = vmatprep.subr.mxu0 0.0
        %927 = vmatpush1.xpose.msra.mxu0 0.0
        %928 = vmatprep.subr.mxu0 0.0
        %929 = vmatpush1.xpose.msra.mxu0 0.0
        %930 = vmatprep.subr.mxu0 0.0
        %931 = vmatpush1.xpose.msra.mxu0 0.0
        %932 = vmatprep.subr.mxu0 0.0
        %933 = vmatpush1.xpose.msra.mxu0 0.0
        %934 = vmatprep.subr.mxu0 0.0
        %935 = vmatpush1.xpose.msra.mxu0 0.0
        %936 = vmatprep.subr.mxu0 0.0
        %937 = vmatpush1.xpose.msra.mxu0 0.0
        %938 = vmatprep.subr.mxu0 0.0
        %939 = vmatpush1.xpose.msra.mxu0 0.0
        %940 = vmatprep.subr.mxu0 0.0
        %941 = vmatpush1.xpose.msra.mxu0 0.0
        %942 = vmatprep.subr.mxu0 0.0
        %943 = vmatpush1.xpose.msra.mxu0 0.0
        %944 = vmatprep.subr.mxu0 0.0
        %945 = vmatpush1.xpose.msra.mxu0 0.0
        %946 = vmatprep.mubr.f32.mxu0 0.0
        %947 = vmatmul.mubr.f32.gmra.mrb[0].mxu0 %v878
        %v948 = vpop.f32.mrb[0].mxu0
        %v949 = vadd.f32 0.0, %v948
        %v950 = vpop.f32.mrb[0].mxu0
        %951 = vdwg.mxu0
        %v952 = vmul.f32 %v949, 0.35355338
        %v953 = vsel %vm302, %v952, -inf
        %s954 = scalar_lea.vmem [#allocation2], 24
        %v955 = vld [vmem:[%s954] sm:$0xff]
        %v956 = vsel %vm303, %v953, -inf
        %957 = vmax.xlane.f32.xlu0 %v956
        %v958 = vpop.xlane.xlu0 %957
        %v959 = vmax.f32 %v955, %v958
        %v960 = vsub.f32 %v955, %v959
        %v961 = vmul.f32 %v960, 1.442695
        %v962 = vpow.pop %v961
        %964 = vset.pattern.permute.xlu0 0
        %965 = vperm.xlu0 %964, %v959
        %v966 = vpop.permute.xlu0 %965
        %v968 = vsub.f32 %v953, %v966
        %v969 = vmul.f32 %v968, 1.442695
        %v970 = vpow.pop %v969
        %s971 = scalar_lea.vmem [#allocation3], 24
        %v972 = vld [vmem:[%s971] sm:$0xff]
        %v973 = vmul.f32 %v962, %v972
        %v974 = vsel %vm303, %v970, 0.0
        %975 = vadd.xlane.f32.xlu0 %v974
        %v976 = vpop.xlane.xlu0 %975
        %v977 = vadd.f32 %v973, %v976
        %978 = vst.msk [vmem:[%s971] sm:$0xff] %vm404, %v977
        %s979 = scalar_lea.vmem [#allocation4], 24
        %v980 = vld [vmem:[%s979] sm:$0xff]
        %982 = vset.pattern.permute.xlu0 0
        %983 = vperm.xlu0 %982, %v962
        %v984 = vpop.permute.xlu0 %983
        %v986 = vmul.f32 %v984, %v980
        %987 = vrot.lane.b32.xlu0 %v293, 104
        %v988 = vpop.permute.xlu0 %987
        %v991 = vsel %vm303, %v970, 0
        %993 = vmatprep.subr.mxu0 0.0
        %994 = vmatpush1.msra.mxu0 %v988
        %995 = vmatprep.subr.mxu0 0.0
        %996 = vmatpush1.msra.mxu0 0.0
        %997 = vmatprep.subr.mxu0 0.0
        %998 = vmatpush1.msra.mxu0 0.0
        %999 = vmatprep.subr.mxu0 0.0
        %1000 = vmatpush1.msra.mxu0 0.0
        %1001 = vmatprep.subr.mxu0 0.0
        %1002 = vmatpush1.msra.mxu0 0.0
        %1003 = vmatprep.subr.mxu0 0.0
        %1004 = vmatpush1.msra.mxu0 0.0
        %1005 = vmatprep.subr.mxu0 0.0
        %1006 = vmatpush1.msra.mxu0 0.0
        %1007 = vmatprep.subr.mxu0 0.0
        %1008 = vmatpush1.msra.mxu0 0.0
        %1009 = vmatprep.subr.mxu0 0.0
        %1010 = vmatpush1.msra.mxu0 0.0
        %1011 = vmatprep.subr.mxu0 0.0
        %1012 = vmatpush1.msra.mxu0 0.0
        %1013 = vmatprep.subr.mxu0 0.0
        %1014 = vmatpush1.msra.mxu0 0.0
        %1015 = vmatprep.subr.mxu0 0.0
        %1016 = vmatpush1.msra.mxu0 0.0
        %1017 = vmatprep.subr.mxu0 0.0
        %1018 = vmatpush1.msra.mxu0 0.0
        %1019 = vmatprep.subr.mxu0 0.0
        %1020 = vmatpush1.msra.mxu0 0.0
        %1021 = vmatprep.subr.mxu0 0.0
        %1022 = vmatpush1.msra.mxu0 0.0
        %1023 = vmatprep.subr.mxu0 0.0
        %1024 = vmatpush1.msra.mxu0 0.0
        %1025 = vmatprep.subr.mxu0 0.0
        %1026 = vmatpush1.msra.mxu0 0.0
        %1027 = vmatprep.subr.mxu0 0.0
        %1028 = vmatpush1.msra.mxu0 0.0
        %1029 = vmatprep.subr.mxu0 0.0
        %1030 = vmatpush1.msra.mxu0 0.0
        %1031 = vmatprep.subr.mxu0 0.0
        %1032 = vmatpush1.msra.mxu0 0.0
        %1033 = vmatprep.subr.mxu0 0.0
        %1034 = vmatpush1.msra.mxu0 0.0
        %1035 = vmatprep.subr.mxu0 0.0
        %1036 = vmatpush1.msra.mxu0 0.0
        %1037 = vmatprep.subr.mxu0 0.0
        %1038 = vmatpush1.msra.mxu0 0.0
        %1039 = vmatprep.subr.mxu0 0.0
        %1040 = vmatpush1.msra.mxu0 0.0
        %1041 = vmatprep.subr.mxu0 0.0
        %1042 = vmatpush1.msra.mxu0 0.0
        %1043 = vmatprep.subr.mxu0 0.0
        %1044 = vmatpush1.msra.mxu0 0.0
        %1045 = vmatprep.subr.mxu0 0.0
        %1046 = vmatpush1.msra.mxu0 0.0
        %1047 = vmatprep.subr.mxu0 0.0
        %1048 = vmatpush1.msra.mxu0 0.0
        %1049 = vmatprep.subr.mxu0 0.0
        %1050 = vmatpush1.msra.mxu0 0.0
        %1051 = vmatprep.subr.mxu0 0.0
        %1052 = vmatpush1.msra.mxu0 0.0
        %1053 = vmatprep.subr.mxu0 0.0
        %1054 = vmatpush1.msra.mxu0 0.0
        %1055 = vmatprep.subr.mxu0 0.0
        %1056 = vmatpush1.msra.mxu0 0.0
        %1057 = vmatprep.mubr.f32.mxu0 0.0
        %1058 = vmatmul.mubr.f32.gmra.mrb[0].mxu0 %v991
        %v1059 = vpop.f32.mrb[0].mxu0
        %v1060 = vadd.f32 0.0, %v1059
        %v1061 = vpop.f32.mrb[0].mxu0
        %1062 = vdwg.mxu0
        %v1063 = vadd.f32 %v986, %v1060
        %1064 = vst.msk [vmem:[%s979] sm:$0xff] %vm303, %v1063
        %1065 = vst.msk [vmem:[%s954] sm:$0xff] %vm404, %v959
      $region40: #{causal_self_attention.4} parent=31 // pred_fallthru
        _
      // Predicated region
      $region41: #{causal_self_attention.4} parent=31 // pred_check
        %p1066 = pneg %p268
      $region42: #{causal_self_attention.4} parent=31 // pred_check_branch
        %1068 = sbr.rel (%p1066) target = $region44
      $region43: #{causal_self_attention.4} parent=31 // pred_region
        %v1069 = vld [vmem:[#allocation4] sm:$0xff]
        %v1070 = vld [vmem:[#allocation3] sm:$0xff]
        %v1071 = vrcp.pop %v1070
        %1073 = vset.pattern.permute.xlu0 0
        %1074 = vperm.xlu0 %1073, %v1071
        %v1075 = vpop.permute.xlu0 %1074
        %v1077 = vmul.f32 %v1069, %v1075
        %s1078 = scalar_lea.vmem [#allocation4], 8
        %v1079 = vld [vmem:[%s1078] sm:$0xff]
        %s1080 = scalar_lea.vmem [#allocation3], 8
        %v1081 = vld [vmem:[%s1080] sm:$0xff]
        %v1082 = vrcp.pop %v1081
        %1084 = vset.pattern.permute.xlu0 0
        %1085 = vperm.xlu0 %1084, %v1082
        %v1086 = vpop.permute.xlu0 %1085
        %v1088 = vmul.f32 %v1079, %v1086
        %s1089 = scalar_lea.vmem [#allocation4], 16
        %v1090 = vld [vmem:[%s1089] sm:$0xff]
        %s1091 = scalar_lea.vmem [#allocation3], 16
        %v1092 = vld [vmem:[%s1091] sm:$0xff]
        %v1093 = vrcp.pop %v1092
        %1095 = vset.pattern.permute.xlu0 0
        %1096 = vperm.xlu0 %1095, %v1093
        %v1097 = vpop.permute.xlu0 %1096
        %v1099 = vmul.f32 %v1090, %v1097
        %s1100 = scalar_lea.vmem [#allocation4], 24
        %v1101 = vld [vmem:[%s1100] sm:$0xff]
        %s1102 = scalar_lea.vmem [#allocation3], 24
        %v1103 = vld [vmem:[%s1102] sm:$0xff]
        %v1104 = vrcp.pop %v1103
        %1106 = vset.pattern.permute.xlu0 0
        %1107 = vperm.xlu0 %1106, %v1104
        %v1108 = vpop.permute.xlu0 %1107
        %v1110 = vmul.f32 %v1101, %v1108
        %1112 = vrot.lane.b32.xlu0 %v1088, 8
        %v1113 = vpop.permute.xlu0 %1112
        %1116 = vrot.lane.b32.xlu0 %v1099, 16
        %v1117 = vpop.permute.xlu0 %1116
        %1120 = vrot.lane.b32.xlu0 %v1110, 24
        %v1121 = vpop.permute.xlu0 %1120
        %vm1123 = vcmask 64512
        %v1124 = vsel %vm1123, %v1077, %v1113
        %vm1125 = vcmask 130048
        %v1126 = vsel %vm1125, %v1124, %v1117
        %vm1127 = vcmask 195584
        %v1128 = vsel %vm1127, %v1126, %v1121
        %vm1129 = vcmask 261120
        %1130 = vst.msk [vmem:[%s265] sm:$0xff] %vm1129, %v1128
      $region44: #{causal_self_attention.4} parent=31 // pred_fallthru
        _
      %p1131 = scmp.lt.s32.totalorder %s19, 1
      %s1132 = scalar_select %p1131, %s19, 1
      %p1133 = scmp.lt.s32.totalorder %s20, 0
      %s1134 = scalar_select %p1133, %s20, 0
      %s1135 = sadd.s32 %s1134, %s1132
      %s1136 = smul.addr %s1135, 8
      %s1137 = scalar_lea.vmem %s3, %s1136
      // Predicated region
      $region45: #{causal_self_attention.4} parent=31 // pred_check
        %p1138 = pneg %p137
      $region46: #{causal_self_attention.4} parent=31 // pred_check_branch
        %1140 = sbr.rel (%p1138) target = $region48
      $region47: #{causal_self_attention.4} parent=31 // pred_region
        _
      $region48: #{causal_self_attention.4} parent=31 // pred_fallthru
        _
    $region32: #{causal_self_attention.4} parent=5 // pred_fallthru
      _
    %p1141 = scmp.le.s32.totalorder 2, %s9
    // Predicated region
    $region49: #{causal_self_attention.4} parent=5 // pred_check
      %p1142 = pneg %p1141
    $region50: #{causal_self_attention.4} parent=5 // pred_check_branch
      %1144 = sbr.rel (%p1142) target = $region52
    $region51: #{causal_self_attention.4} parent=5 // pred_region
      %s1145 = ssub.s32 %s9, 2
      // Predicated region
      $region53: #{causal_self_attention.4} parent=51 // pred_check
        %p1146 = pneg %p143
      $region54: #{causal_self_attention.4} parent=51 // pred_check_branch
        %1148 = sbr.rel (%p1146) target = $region56
      $region55: #{causal_self_attention.4} parent=51 // pred_region
        %p1149 = scmp.lt.s32.totalorder %s22, 1
        %s1150 = scalar_select %p1149, %s22, 1
        %p1151 = scmp.lt.s32.totalorder %s23, 0
        %s1152 = scalar_select %p1151, %s23, 0
        %s1153 = sadd.s32 %s1152, %s1150
        %s1154 = smul.addr %s1153, 8
        %s1155 = scalar_lea.vmem %s3, %s1154
      $region56: #{causal_self_attention.4} parent=51 // pred_fallthru
        _
    $region52: #{causal_self_attention.4} parent=5 // pred_fallthru
      _
  $region6: #{causal_self_attention.4} parent=0 // loop_footer
    %s13 = sadd.s32 1, %s9
  $region7: #{causal_self_attention.4} parent=0 // loop_footer_branch
    %8 = sbr.rel target = $region3
  $region8: #{causal_self_attention.4} parent=0 // loop_exit
    _

</llo_original>
